<compile_context>
chip_gen: v7x
topology: tpu7x:2x2x1
jax: 0.10.0
libtpu: 0.0.40
codegen_flags: <defaults>
</compile_context>

<pallas_src>
import functools
import math

import jax
import jax.numpy as jnp
from jax import lax
from jax.experimental import pallas as pl
from jax.experimental.pallas import tpu as pltpu


# --------------------------------------------------------------------------
# In-kernel math helpers (traced inside the Pallas kernel body)
# --------------------------------------------------------------------------
def _uer_layer_norm(x, gamma, beta, eps=1e-6):
    # UER LayerNorm: gamma * (x - mean) / (std + eps) + beta; torch.std is
    # unbiased (ddof=1) by default.
    h = x.shape[-1]
    mean = jnp.mean(x, axis=-1, keepdims=True)
    d = x - mean
    var = jnp.sum(d * d, axis=-1, keepdims=True) * (1.0 / (h - 1))
    std = jnp.sqrt(var)
    inv = pl.reciprocal(std + eps, approx=True)   # EUP reciprocal, frees VALU slots
    return gamma * (d * inv) + beta


def _gelu_exact(x):
    # UER gelu: 0.5 * x * (1 + erf(x / sqrt(2)))
    return 0.5 * x * (1.0 + lax.erf(x * (1.0 / math.sqrt(2.0))))


def _softmax_last(x):
    m = jnp.max(x, axis=-1, keepdims=True)
    e = jnp.exp(x - m)
    return e * pl.reciprocal(jnp.sum(e, axis=-1, keepdims=True), approx=True)


# --------------------------------------------------------------------------
# Pallas kernel: one (batch element, query tile) per grid step
# --------------------------------------------------------------------------
def _transformer_layer_kernel(
    xq_ref, xkv_ref, mask_ref,
    wq_ref, wk_ref, wv_ref, wo_ref, w1_ref, w2_ref,
    vecs_ref, b1_ref,
    o_ref,
    k_sc, v_sc,
    *, num_heads,
):
    qi = pl.program_id(1)

    vecs = vecs_ref[...]                               # (9, H) f32
    bq, bk, bv, bo = vecs[0:1], vecs[1:2], vecs[2:3], vecs[3:4]
    g1, be1 = vecs[4:5], vecs[5:6]
    b2, g2, be2 = vecs[6:7], vecs[7:8], vecs[8:9]

    # ---- K/V projections for the full sequence: once per batch element ----
    @pl.when(qi == 0)
    def _():
        xkv = xkv_ref[...].astype(jnp.bfloat16)        # (S, H)
        k = jnp.dot(xkv, wk_ref[...], preferred_element_type=jnp.float32) + bk
        v = jnp.dot(xkv, wv_ref[...], preferred_element_type=jnp.float32) + bv
        k_sc[...] = k.astype(jnp.bfloat16)
        v_sc[...] = v.astype(jnp.bfloat16)

    x = xq_ref[...]                                    # (TQ, H) f32, residual input
    tq, hidden = x.shape
    s_len = k_sc.shape[0]
    dh = hidden // num_heads

    x_bf = x.astype(jnp.bfloat16)
    # 1/sqrt(dh) is already folded into wq / bq by the wrapper.
    q = jnp.dot(x_bf, wq_ref[...], preferred_element_type=jnp.float32) + bq

    # ---- batched multi-head attention (heads = batch dim of dot_general) ---
    q3 = q.astype(jnp.bfloat16).reshape(tq, num_heads, dh).transpose(1, 0, 2)   # (nh, TQ, dh)
    k3 = k_sc[...].reshape(s_len, num_heads, dh).transpose(1, 0, 2)             # (nh, S, dh)
    v3 = v_sc[...].reshape(s_len, num_heads, dh).transpose(1, 0, 2)             # (nh, S, dh)

    scores = jnp.einsum("hqd,hkd->hqk", q3, k3,
                        preferred_element_type=jnp.float32)                     # (nh, TQ, S)
    scores = scores + mask_ref[...].astype(jnp.float32)[None, :, :]
    probs = _softmax_last(scores)

    ctx = jnp.einsum("hqk,hkd->hqd", probs.astype(jnp.bfloat16), v3,
                     preferred_element_type=jnp.float32)                        # (nh, TQ, dh)
    ctx = ctx.transpose(1, 0, 2).reshape(tq, hidden)                            # (TQ, H)

    attn = jnp.dot(ctx.astype(jnp.bfloat16), wo_ref[...],
                   preferred_element_type=jnp.float32) + bo

    # dropout1 is identity (eval mode)
    inter = _uer_layer_norm(attn + x, g1, be1)

    # ---- position-wise feed forward ---------------------------------------
    ff = jnp.dot(inter.astype(jnp.bfloat16), w1_ref[...],
                 preferred_element_type=jnp.float32) + b1_ref[...]
    ff = _gelu_exact(ff)
    ff = jnp.dot(ff.astype(jnp.bfloat16), w2_ref[...],
                 preferred_element_type=jnp.float32) + b2

    # dropout2 is identity (eval mode)
    out = _uer_layer_norm(ff + inter, g2, be2)
    o_ref[...] = out.astype(o_ref.dtype)


# --------------------------------------------------------------------------
# Wrapper
# --------------------------------------------------------------------------
def transformer_layer(hidden, mask, params, num_heads, *, tq=None):
    """hidden: (B, S, H) f32; mask: (B, 1, S, S) additive f32."""
    B, S, H = hidden.shape
    F = params["w1"].shape[1]
    assert H % num_heads == 0, "num_heads must divide hidden size"
    assert mask.shape == (B, 1, S, S), "mask must be (B, 1, S, S)"

    dh = H // num_heads
    scale = 1.0 / math.sqrt(dh)

    if tq is None:
        tq = min(S, 128)
    if S % tq != 0:
        tq = S
    nq = S // tq

    f32, bf16 = jnp.float32, jnp.bfloat16

    # Fold 1/sqrt(dh) into the query projection; store weights in bf16 in HBM.
    wq = (params["wq"].astype(f32) * scale).astype(bf16)
    wk = params["wk"].astype(bf16)
    wv = params["wv"].astype(bf16)
    wo = params["wo"].astype(bf16)
    w1 = params["w1"].astype(bf16)
    w2 = params["w2"].astype(bf16)

    # Pack all (1, H) per-channel vectors into one (9, H) block.
    vecs = jnp.concatenate(
        [params["bq"].astype(f32) * scale,
         params["bk"], params["bv"], params["bo"],
         params["gamma1"], params["beta1"],
         params["b2"], params["gamma2"], params["beta2"]],
        axis=0).astype(f32)                                    # (9, H)
    b1 = params["b1"].astype(f32)                              # (1, F)

    mask3 = mask.reshape(B, S, S).astype(bf16)                 # halve mask DMA bytes

    const2d = lambda shape: pl.BlockSpec(shape, lambda b, q: (0, 0))

    in_specs = [
        pl.BlockSpec((None, tq, H), lambda b, q: (b, q, 0)),   # hidden (query tile)
        pl.BlockSpec((None, S, H), lambda b, q: (b, 0, 0)),    # hidden (full seq, for K/V)
        pl.BlockSpec((None, tq, S), lambda b, q: (b, q, 0)),   # additive mask tile
        const2d((H, H)), const2d((H, H)), const2d((H, H)), const2d((H, H)),  # wq wk wv wo
        const2d((H, F)), const2d((F, H)),                      # w1, w2
        const2d((9, H)), const2d((1, F)),                      # packed vectors, b1
    ]

    kernel = functools.partial(_transformer_layer_kernel, num_heads=num_heads)

    return pl.pallas_call(
        kernel,
        out_shape=jax.ShapeDtypeStruct((B, S, H), jnp.float32),
        grid_spec=pltpu.PrefetchScalarGridSpec(
            num_scalar_prefetch=0,
            grid=(B, nq),
            in_specs=in_specs,
            out_specs=pl.BlockSpec((None, tq, H), lambda b, q: (b, q, 0)),
            scratch_shapes=[
                pltpu.VMEM((S, H), jnp.bfloat16),   # K for the full sequence
                pltpu.VMEM((S, H), jnp.bfloat16),   # V for the full sequence
            ],
        ),
        compiler_params=pltpu.CompilerParams(
            dimension_semantics=("parallel", "arbitrary"),
            vmem_limit_bytes=64 * 1024 * 1024,
        ),
    )(
        hidden, hidden, mask3,
        wq, wk, wv, wo, w1, w2, vecs, b1,
    )


# --------------------------------------------------------------------------
# Plain-JAX reference (same math, full f32) for a sanity check
# --------------------------------------------------------------------------
def transformer_layer_ref(hidden, mask, p, num_heads):
    B, S, H = hidden.shape
    dh = H // num_heads

    def ln(x, g, b, eps=1e-6):
        mean = jnp.mean(x, axis=-1, keepdims=True)
        d = x - mean
        std = jnp.sqrt(jnp.sum(d * d, axis=-1, keepdims=True) / (H - 1))
        return g * d / (std + eps) + b

    q = hidden @ p["wq"] + p["bq"]
    k = hidden @ p["wk"] + p["bk"]
    v = hidden @ p["wv"] + p["bv"]

    def split(t):  # (B,S,H) -> (B,heads,S,dh)
        return t.reshape(B, S, num_heads, dh).transpose(0, 2, 1, 3)

    qh, kh, vh = split(q), split(k), split(v)
    scores = jnp.einsum("bhqd,bhkd->bhqk", qh, kh) / math.sqrt(dh)
    scores = scores + mask  # mask broadcasts over heads
    probs = jax.nn.softmax(scores, axis=-1)
    ctx = jnp.einsum("bhqk,bhkd->bhqd", probs, vh)
    ctx = ctx.transpose(0, 2, 1, 3).reshape(B, S, H)
    attn = ctx @ p["wo"] + p["bo"]

    inter = ln(attn + hidden, p["gamma1"], p["beta1"])
    ff = inter @ p["w1"] + p["b1"]
    ff = 0.5 * ff * (1.0 + lax.erf(ff / math.sqrt(2.0)))
    ff = ff @ p["w2"] + p["b2"]
    return ln(ff + inter, p["gamma2"], p["beta2"])


# --------------------------------------------------------------------------
# Main
# --------------------------------------------------------------------------
if __name__ == "__main__":
    B, S, H, NH, F = 2, 8, 32, 4, 64
    key = jax.random.PRNGKey(0)
    ks = jax.random.split(key, 16)

    def w(k, shape, scale=0.05):
        return (scale * jax.random.normal(k, shape)).astype(jnp.float32)

    params = {
        "wq": w(ks[0], (H, H)), "bq": w(ks[1], (1, H)),
        "wk": w(ks[2], (H, H)), "bk": w(ks[3], (1, H)),
        "wv": w(ks[4], (H, H)), "bv": w(ks[5], (1, H)),
        "wo": w(ks[6], (H, H)), "bo": w(ks[7], (1, H)),
        "gamma1": jnp.ones((1, H), jnp.float32),
        "beta1": jnp.zeros((1, H), jnp.float32),
        "w1": w(ks[8], (H, F)), "b1": w(ks[9], (1, F)),
        "w2": w(ks[10], (F, H)), "b2": w(ks[11], (1, H)),
        "gamma2": jnp.ones((1, H), jnp.float32),
        "beta2": jnp.zeros((1, H), jnp.float32),
    }

    hidden = jax.random.normal(ks[12], (B, S, H), dtype=jnp.float32)

    # Additive attention mask: last two positions of batch 1 are padding.
    visible = jnp.ones((B, 1, S, S), jnp.float32)
    visible = visible.at[1, :, :, S - 2:].set(0.0)
    mask = (1.0 - visible) * -10000.0

    out = transformer_layer(hidden, mask, params, NH)
    out = jax.block_until_ready(out)

    ref = transformer_layer_ref(hidden, mask, params, NH)
    assert out.shape == (B, S, H)
    assert bool(jnp.all(jnp.isfinite(out)))
    max_err = float(jnp.max(jnp.abs(out - ref)))
    # bf16 MXU inputs + approximate EUP reciprocals vs pure-f32 reference.
    assert bool(jnp.allclose(out, ref, rtol=3e-2, atol=3e-2)), max_err

    print("KERNEL_OK")
</pallas_src>

<mosaic_0001>
module attributes {stable_mosaic.version = 11 : i64} {
  func.func @_transformer_layer_kernel(%arg0: i32, %arg1: i32, %arg2: memref<1x8x32xf32, #tpu.memory_space<vmem>>, %arg3: memref<1x8x32xf32, #tpu.memory_space<vmem>>, %arg4: memref<1x8x8xbf16, #tpu.memory_space<vmem>>, %arg5: memref<32x32xbf16, #tpu.memory_space<vmem>>, %arg6: memref<32x32xbf16, #tpu.memory_space<vmem>>, %arg7: memref<32x32xbf16, #tpu.memory_space<vmem>>, %arg8: memref<32x32xbf16, #tpu.memory_space<vmem>>, %arg9: memref<32x64xbf16, #tpu.memory_space<vmem>>, %arg10: memref<64x32xbf16, #tpu.memory_space<vmem>>, %arg11: memref<9x32xf32, #tpu.memory_space<vmem>>, %arg12: memref<1x64xf32, #tpu.memory_space<vmem>>, %arg13: memref<1x8x32xf32, #tpu.memory_space<vmem>>, %arg14: memref<8x32xbf16, #tpu.memory_space<vmem>>, %arg15: memref<8x32xbf16, #tpu.memory_space<vmem>>) attributes {dimension_semantics = [#tpu.dimension_semantics<parallel>, #tpu.dimension_semantics<arbitrary>], iteration_bounds = array<i64: 2, 1>, scalar_prefetch = 0 : i64, scratch_operands = 2 : i64, tpu.core_type = #tpu.core_type<tc>, window_params = [{transform_indices = @transform_0, window_bounds = array<i64: 1, 8, 32>}, {transform_indices = @transform_1, window_bounds = array<i64: 1, 8, 32>}, {transform_indices = @transform_2, window_bounds = array<i64: 1, 8, 8>}, {pipeline_mode = #tpu.pipeline_mode<synchronous>, transform_indices = @transform_3, window_bounds = array<i64: 32, 32>}, {pipeline_mode = #tpu.pipeline_mode<synchronous>, transform_indices = @transform_4, window_bounds = array<i64: 32, 32>}, {pipeline_mode = #tpu.pipeline_mode<synchronous>, transform_indices = @transform_5, window_bounds = array<i64: 32, 32>}, {pipeline_mode = #tpu.pipeline_mode<synchronous>, transform_indices = @transform_6, window_bounds = array<i64: 32, 32>}, {pipeline_mode = #tpu.pipeline_mode<synchronous>, transform_indices = @transform_7, window_bounds = array<i64: 32, 64>}, {pipeline_mode = #tpu.pipeline_mode<synchronous>, transform_indices = @transform_8, window_bounds = array<i64: 64, 32>}, {pipeline_mode = #tpu.pipeline_mode<synchronous>, transform_indices = @transform_9, window_bounds = array<i64: 9, 32>}, {pipeline_mode = #tpu.pipeline_mode<synchronous>, transform_indices = @transform_10, window_bounds = array<i64: 1, 64>}, {transform_indices = @transform_11, window_bounds = array<i64: 1, 8, 32>}]} {
    %c0 = arith.constant 0 : index
    %c0_0 = arith.constant 0 : index
    %0 = vector.load %arg11[%c0, %c0_0] : memref<9x32xf32, #tpu.memory_space<vmem>>, vector<9x32xf32>
    %1 = vector.extract_strided_slice %0 {offsets = [0, 0], sizes = [1, 32], strides = [1, 1]} : vector<9x32xf32> to vector<1x32xf32>
    %2 = vector.extract_strided_slice %0 {offsets = [1, 0], sizes = [1, 32], strides = [1, 1]} : vector<9x32xf32> to vector<1x32xf32>
    %3 = vector.extract_strided_slice %0 {offsets = [2, 0], sizes = [1, 32], strides = [1, 1]} : vector<9x32xf32> to vector<1x32xf32>
    %4 = vector.extract_strided_slice %0 {offsets = [3, 0], sizes = [1, 32], strides = [1, 1]} : vector<9x32xf32> to vector<1x32xf32>
    %5 = vector.extract_strided_slice %0 {offsets = [4, 0], sizes = [1, 32], strides = [1, 1]} : vector<9x32xf32> to vector<1x32xf32>
    %6 = vector.extract_strided_slice %0 {offsets = [5, 0], sizes = [1, 32], strides = [1, 1]} : vector<9x32xf32> to vector<1x32xf32>
    %7 = vector.extract_strided_slice %0 {offsets = [6, 0], sizes = [1, 32], strides = [1, 1]} : vector<9x32xf32> to vector<1x32xf32>
    %8 = vector.extract_strided_slice %0 {offsets = [7, 0], sizes = [1, 32], strides = [1, 1]} : vector<9x32xf32> to vector<1x32xf32>
    %9 = vector.extract_strided_slice %0 {offsets = [8, 0], sizes = [1, 32], strides = [1, 1]} : vector<9x32xf32> to vector<1x32xf32>
    %c0_i32 = arith.constant 0 : i32
    %10 = arith.cmpi eq, %arg1, %c0_i32 : i32
    %11 = arith.extui %10 : i1 to i32
    %c0_i32_1 = arith.constant 0 : i32
    %12 = arith.cmpi ne, %11, %c0_i32_1 : i32
    scf.if %12 {
      %c0_45 = arith.constant 0 : index
      %c0_46 = arith.constant 0 : index
      %c0_47 = arith.constant 0 : index
      %121 = vector.load %arg3[%c0_45, %c0_46, %c0_47] : memref<1x8x32xf32, #tpu.memory_space<vmem>>, vector<1x8x32xf32>
      %122 = vector.shape_cast %121 : vector<1x8x32xf32> to vector<8x32xf32>
      %123 = arith.truncf %122 : vector<8x32xf32> to vector<8x32xbf16>
      %c0_48 = arith.constant 0 : index
      %c0_49 = arith.constant 0 : index
      %124 = vector.load %arg6[%c0_48, %c0_49] : memref<32x32xbf16, #tpu.memory_space<vmem>>, vector<32x32xbf16>
      %cst_50 = arith.constant dense<0.000000e+00> : vector<8x32xf32>
      %125 = tpu.matmul %123, %124, %cst_50 {dimension_numbers = #tpu.dot_dimension_numbers<[1], [0], [0], [1], [0, 0, 1, 1], [], []>} : vector<8x32xbf16>, vector<32x32xbf16>, vector<8x32xf32> -> vector<8x32xf32>
      %126 = vector.broadcast %2 : vector<1x32xf32> to vector<8x32xf32>
      %127 = arith.addf %125, %126 : vector<8x32xf32>
      %c0_51 = arith.constant 0 : index
      %c0_52 = arith.constant 0 : index
      %128 = vector.load %arg7[%c0_51, %c0_52] : memref<32x32xbf16, #tpu.memory_space<vmem>>, vector<32x32xbf16>
      %cst_53 = arith.constant dense<0.000000e+00> : vector<8x32xf32>
      %129 = tpu.matmul %123, %128, %cst_53 {dimension_numbers = #tpu.dot_dimension_numbers<[1], [0], [0], [1], [0, 0, 1, 1], [], []>} : vector<8x32xbf16>, vector<32x32xbf16>, vector<8x32xf32> -> vector<8x32xf32>
      %130 = vector.broadcast %3 : vector<1x32xf32> to vector<8x32xf32>
      %131 = arith.addf %129, %130 : vector<8x32xf32>
      %132 = arith.truncf %127 : vector<8x32xf32> to vector<8x32xbf16>
      %c0_54 = arith.constant 0 : index
      %c0_55 = arith.constant 0 : index
      %133 = vector.load %arg14[%c0_54, %c0_55] : memref<8x32xbf16, #tpu.memory_space<vmem>>, vector<8x32xbf16>
      tpu.vector_store %arg14[%c0_54, %c0_55], %132 {strides = array<i32>} : memref<8x32xbf16, #tpu.memory_space<vmem>>, vector<8x32xbf16>,
      %134 = arith.truncf %131 : vector<8x32xf32> to vector<8x32xbf16>
      %c0_56 = arith.constant 0 : index
      %c0_57 = arith.constant 0 : index
      %135 = vector.load %arg15[%c0_56, %c0_57] : memref<8x32xbf16, #tpu.memory_space<vmem>>, vector<8x32xbf16>
      tpu.vector_store %arg15[%c0_56, %c0_57], %134 {strides = array<i32>} : memref<8x32xbf16, #tpu.memory_space<vmem>>, vector<8x32xbf16>,
    } else {
    }
    %c0_2 = arith.constant 0 : index
    %c0_3 = arith.constant 0 : index
    %c0_4 = arith.constant 0 : index
    %13 = vector.load %arg2[%c0_2, %c0_3, %c0_4] : memref<1x8x32xf32, #tpu.memory_space<vmem>>, vector<1x8x32xf32>
    %14 = vector.shape_cast %13 : vector<1x8x32xf32> to vector<8x32xf32>
    %15 = arith.truncf %14 : vector<8x32xf32> to vector<8x32xbf16>
    %c0_5 = arith.constant 0 : index
    %c0_6 = arith.constant 0 : index
    %16 = vector.load %arg5[%c0_5, %c0_6] : memref<32x32xbf16, #tpu.memory_space<vmem>>, vector<32x32xbf16>
    %cst = arith.constant dense<0.000000e+00> : vector<8x32xf32>
    %17 = tpu.matmul %15, %16, %cst {dimension_numbers = #tpu.dot_dimension_numbers<[1], [0], [0], [1], [0, 0, 1, 1], [], []>} : vector<8x32xbf16>, vector<32x32xbf16>, vector<8x32xf32> -> vector<8x32xf32>
    %18 = vector.broadcast %1 : vector<1x32xf32> to vector<8x32xf32>
    %19 = arith.addf %17, %18 : vector<8x32xf32>
    %20 = arith.truncf %19 : vector<8x32xf32> to vector<8x32xbf16>
    %21 = vector.shape_cast %20 : vector<8x32xbf16> to vector<8x4x8xbf16>
    %22 = tpu.transpose %21, [1, 0, 2] : vector<8x4x8xbf16> -> vector<4x8x8xbf16>
    %c0_7 = arith.constant 0 : index
    %c0_8 = arith.constant 0 : index
    %23 = vector.load %arg14[%c0_7, %c0_8] : memref<8x32xbf16, #tpu.memory_space<vmem>>, vector<8x32xbf16>
    %24 = vector.shape_cast %23 : vector<8x32xbf16> to vector<8x4x8xbf16>
    %25 = tpu.transpose %24, [1, 0, 2] : vector<8x4x8xbf16> -> vector<4x8x8xbf16>
    %c0_9 = arith.constant 0 : index
    %c0_10 = arith.constant 0 : index
    %26 = vector.load %arg15[%c0_9, %c0_10] : memref<8x32xbf16, #tpu.memory_space<vmem>>, vector<8x32xbf16>
    %27 = vector.shape_cast %26 : vector<8x32xbf16> to vector<8x4x8xbf16>
    %28 = tpu.transpose %27, [1, 0, 2] : vector<8x4x8xbf16> -> vector<4x8x8xbf16>
    "tpu.trace_start"() <{level = 10 : i32, message = "hqd,hkd->hqk"}> : () -> ()
    %cst_11 = arith.constant dense<0.000000e+00> : vector<4x8x8xf32>
    %29 = tpu.matmul %22, %25, %cst_11 {dimension_numbers = #tpu.dot_dimension_numbers<[2], [2], [1], [1], [0, 0, 0, 1, 1, 1], [0], [0]>} : vector<4x8x8xbf16>, vector<4x8x8xbf16>, vector<4x8x8xf32> -> vector<4x8x8xf32>
    "tpu.trace_stop"() : () -> ()
    %c0_12 = arith.constant 0 : index
    %c0_13 = arith.constant 0 : index
    %c0_14 = arith.constant 0 : index
    %30 = vector.load %arg4[%c0_12, %c0_13, %c0_14] : memref<1x8x8xbf16, #tpu.memory_space<vmem>>, vector<1x8x8xbf16>
    %31 = vector.shape_cast %30 : vector<1x8x8xbf16> to vector<8x8xbf16>
    %32 = arith.extf %31 : vector<8x8xbf16> to vector<8x8xf32>
    %33 = vector.shape_cast %32 : vector<8x8xf32> to vector<1x8x8xf32>
    %34 = vector.broadcast %33 : vector<1x8x8xf32> to vector<4x8x8xf32>
    %35 = arith.addf %29, %34 : vector<4x8x8xf32>
    %cst_15 = arith.constant dense<0xFF800000> : vector<4x8xf32>
    %36 = vector.multi_reduction <maximumf>, %35, %cst_15 [2] : vector<4x8x8xf32> to vector<4x8xf32>
    %37 = vector.shape_cast %36 : vector<4x8xf32> to vector<4x8x1xf32>
    %38 = vector.broadcast %37 : vector<4x8x1xf32> to vector<4x8x8xf32>
    %39 = arith.subf %35, %38 : vector<4x8x8xf32>
    %40 = math.exp %39 : vector<4x8x8xf32>
    %cst_16 = arith.constant dense<0.000000e+00> : vector<4x8xf32>
    %41 = vector.multi_reduction <add>, %40, %cst_16 [2] : vector<4x8x8xf32> to vector<4x8xf32>
    %42 = vector.shape_cast %41 : vector<4x8xf32> to vector<4x8x1xf32>
    %43 = tpu.reciprocal %42 {approx = true} : vector<4x8x1xf32> -> vector<4x8x1xf32>
    %44 = vector.broadcast %43 : vector<4x8x1xf32> to vector<4x8x8xf32>
    %45 = arith.mulf %40, %44 : vector<4x8x8xf32>
    %46 = arith.truncf %45 : vector<4x8x8xf32> to vector<4x8x8xbf16>
    "tpu.trace_start"() <{level = 10 : i32, message = "hqk,hkd->hqd"}> : () -> ()
    %cst_17 = arith.constant dense<0.000000e+00> : vector<4x8x8xf32>
    %47 = tpu.matmul %46, %28, %cst_17 {dimension_numbers = #tpu.dot_dimension_numbers<[2], [1], [1], [2], [0, 0, 0, 1, 1, 2], [0], [0]>} : vector<4x8x8xbf16>, vector<4x8x8xbf16>, vector<4x8x8xf32> -> vector<4x8x8xf32>
    "tpu.trace_stop"() : () -> ()
    %48 = tpu.transpose %47, [1, 0, 2] : vector<4x8x8xf32> -> vector<8x4x8xf32>
    %49 = vector.shape_cast %48 : vector<8x4x8xf32> to vector<8x32xf32>
    %50 = arith.truncf %49 : vector<8x32xf32> to vector<8x32xbf16>
    %c0_18 = arith.constant 0 : index
    %c0_19 = arith.constant 0 : index
    %51 = vector.load %arg8[%c0_18, %c0_19] : memref<32x32xbf16, #tpu.memory_space<vmem>>, vector<32x32xbf16>
    %cst_20 = arith.constant dense<0.000000e+00> : vector<8x32xf32>
    %52 = tpu.matmul %50, %51, %cst_20 {dimension_numbers = #tpu.dot_dimension_numbers<[1], [0], [0], [1], [0, 0, 1, 1], [], []>} : vector<8x32xbf16>, vector<32x32xbf16>, vector<8x32xf32> -> vector<8x32xf32>
    %53 = vector.broadcast %4 : vector<1x32xf32> to vector<8x32xf32>
    %54 = arith.addf %52, %53 : vector<8x32xf32>
    %55 = arith.addf %54, %14 : vector<8x32xf32>
    %cst_21 = arith.constant dense<0.000000e+00> : vector<8xf32>
    %56 = vector.multi_reduction <add>, %55, %cst_21 [1] : vector<8x32xf32> to vector<8xf32>
    %57 = vector.shape_cast %56 : vector<8xf32> to vector<8x1xf32>
    %cst_22 = arith.constant 3.200000e+01 : f32
    %58 = vector.broadcast %cst_22 : f32 to vector<8x1xf32>
    %59 = arith.divf %57, %58 : vector<8x1xf32>
    %60 = vector.broadcast %59 : vector<8x1xf32> to vector<8x32xf32>
    %61 = arith.subf %55, %60 : vector<8x32xf32>
    %62 = arith.mulf %61, %61 : vector<8x32xf32>
    %cst_23 = arith.constant dense<0.000000e+00> : vector<8xf32>
    %63 = vector.multi_reduction <add>, %62, %cst_23 [1] : vector<8x32xf32> to vector<8xf32>
    %64 = vector.shape_cast %63 : vector<8xf32> to vector<8x1xf32>
    %cst_24 = arith.constant 0.0322580636 : f32
    %65 = vector.broadcast %cst_24 : f32 to vector<8x1xf32>
    %66 = arith.mulf %64, %65 : vector<8x1xf32>
    %67 = math.sqrt %66 : vector<8x1xf32>
    %cst_25 = arith.constant 9.99999997E-7 : f32
    %68 = vector.broadcast %cst_25 : f32 to vector<8x1xf32>
    %69 = arith.addf %67, %68 : vector<8x1xf32>
    %70 = tpu.reciprocal %69 {approx = true} : vector<8x1xf32> -> vector<8x1xf32>
    %71 = vector.broadcast %70 : vector<8x1xf32> to vector<8x32xf32>
    %72 = arith.mulf %61, %71 : vector<8x32xf32>
    %73 = vector.broadcast %5 : vector<1x32xf32> to vector<8x32xf32>
    %74 = arith.mulf %73, %72 : vector<8x32xf32>
    %75 = vector.broadcast %6 : vector<1x32xf32> to vector<8x32xf32>
    %76 = arith.addf %74, %75 : vector<8x32xf32>
    %77 = arith.truncf %76 : vector<8x32xf32> to vector<8x32xbf16>
    %c0_26 = arith.constant 0 : index
    %c0_27 = arith.constant 0 : index
    %78 = vector.load %arg9[%c0_26, %c0_27] : memref<32x64xbf16, #tpu.memory_space<vmem>>, vector<32x64xbf16>
    %cst_28 = arith.constant dense<0.000000e+00> : vector<8x64xf32>
    %79 = tpu.matmul %77, %78, %cst_28 {dimension_numbers = #tpu.dot_dimension_numbers<[1], [0], [0], [1], [0, 0, 1, 1], [], []>} : vector<8x32xbf16>, vector<32x64xbf16>, vector<8x64xf32> -> vector<8x64xf32>
    %c0_29 = arith.constant 0 : index
    %c0_30 = arith.constant 0 : index
    %80 = vector.load %arg12[%c0_29, %c0_30] : memref<1x64xf32, #tpu.memory_space<vmem>>, vector<1x64xf32>
    %81 = vector.broadcast %80 : vector<1x64xf32> to vector<8x64xf32>
    %82 = arith.addf %79, %81 : vector<8x64xf32>
    %cst_31 = arith.constant 5.000000e-01 : f32
    %83 = vector.broadcast %cst_31 : f32 to vector<8x64xf32>
    %84 = arith.mulf %83, %82 : vector<8x64xf32>
    %cst_32 = arith.constant 0.707106769 : f32
    %85 = vector.broadcast %cst_32 : f32 to vector<8x64xf32>
    %86 = arith.mulf %82, %85 : vector<8x64xf32>
    %87 = math.erf %86 : vector<8x64xf32>
    %cst_33 = arith.constant 1.000000e+00 : f32
    %88 = vector.broadcast %cst_33 : f32 to vector<8x64xf32>
    %89 = arith.addf %88, %87 : vector<8x64xf32>
    %90 = arith.mulf %84, %89 : vector<8x64xf32>
    %91 = arith.truncf %90 : vector<8x64xf32> to vector<8x64xbf16>
    %c0_34 = arith.constant 0 : index
    %c0_35 = arith.constant 0 : index
    %92 = vector.load %arg10[%c0_34, %c0_35] : memref<64x32xbf16, #tpu.memory_space<vmem>>, vector<64x32xbf16>
    %cst_36 = arith.constant dense<0.000000e+00> : vector<8x32xf32>
    %93 = tpu.matmul %91, %92, %cst_36 {dimension_numbers = #tpu.dot_dimension_numbers<[1], [0], [0], [1], [0, 0, 1, 1], [], []>} : vector<8x64xbf16>, vector<64x32xbf16>, vector<8x32xf32> -> vector<8x32xf32>
    %94 = vector.broadcast %7 : vector<1x32xf32> to vector<8x32xf32>
    %95 = arith.addf %93, %94 : vector<8x32xf32>
    %96 = arith.addf %95, %76 : vector<8x32xf32>
    %cst_37 = arith.constant dense<0.000000e+00> : vector<8xf32>
    %97 = vector.multi_reduction <add>, %96, %cst_37 [1] : vector<8x32xf32> to vector<8xf32>
    %98 = vector.shape_cast %97 : vector<8xf32> to vector<8x1xf32>
    %cst_38 = arith.constant 3.200000e+01 : f32
    %99 = vector.broadcast %cst_38 : f32 to vector<8x1xf32>
    %100 = arith.divf %98, %99 : vector<8x1xf32>
    %101 = vector.broadcast %100 : vector<8x1xf32> to vector<8x32xf32>
    %102 = arith.subf %96, %101 : vector<8x32xf32>
    %103 = arith.mulf %102, %102 : vector<8x32xf32>
    %cst_39 = arith.constant dense<0.000000e+00> : vector<8xf32>
    %104 = vector.multi_reduction <add>, %103, %cst_39 [1] : vector<8x32xf32> to vector<8xf32>
    %105 = vector.shape_cast %104 : vector<8xf32> to vector<8x1xf32>
    %cst_40 = arith.constant 0.0322580636 : f32
    %106 = vector.broadcast %cst_40 : f32 to vector<8x1xf32>
    %107 = arith.mulf %105, %106 : vector<8x1xf32>
    %108 = math.sqrt %107 : vector<8x1xf32>
    %cst_41 = arith.constant 9.99999997E-7 : f32
    %109 = vector.broadcast %cst_41 : f32 to vector<8x1xf32>
    %110 = arith.addf %108, %109 : vector<8x1xf32>
    %111 = tpu.reciprocal %110 {approx = true} : vector<8x1xf32> -> vector<8x1xf32>
    %112 = vector.broadcast %111 : vector<8x1xf32> to vector<8x32xf32>
    %113 = arith.mulf %102, %112 : vector<8x32xf32>
    %114 = vector.broadcast %8 : vector<1x32xf32> to vector<8x32xf32>
    %115 = arith.mulf %114, %113 : vector<8x32xf32>
    %116 = vector.broadcast %9 : vector<1x32xf32> to vector<8x32xf32>
    %117 = arith.addf %115, %116 : vector<8x32xf32>
    %c0_42 = arith.constant 0 : index
    %c0_43 = arith.constant 0 : index
    %c0_44 = arith.constant 0 : index
    %118 = vector.load %arg13[%c0_42, %c0_43, %c0_44] : memref<1x8x32xf32, #tpu.memory_space<vmem>>, vector<1x8x32xf32>
    %119 = vector.shape_cast %118 : vector<1x8x32xf32> to vector<8x32xf32>
    %120 = vector.shape_cast %117 : vector<8x32xf32> to vector<1x8x32xf32>
    tpu.vector_store %arg13[%c0_42, %c0_43, %c0_44], %120 {strides = array<i32>} : memref<1x8x32xf32, #tpu.memory_space<vmem>>, vector<1x8x32xf32>,
    return
  }
  func.func @transform_0(%arg0: i32, %arg1: i32) -> (i32, i32, i32) {
    %c0_i32 = arith.constant 0 : i32
    %c0_i32_0 = arith.constant 0 : i32
    return %arg0, %arg1, %c0_i32 : i32, i32, i32
  }
  func.func @transform_1(%arg0: i32, %arg1: i32) -> (i32, i32, i32) {
    %c0_i32 = arith.constant 0 : i32
    %c0_i32_0 = arith.constant 0 : i32
    %c0_i32_1 = arith.constant 0 : i32
    return %arg0, %c0_i32, %c0_i32_0 : i32, i32, i32
  }
  func.func @transform_2(%arg0: i32, %arg1: i32) -> (i32, i32, i32) {
    %c0_i32 = arith.constant 0 : i32
    %c0_i32_0 = arith.constant 0 : i32
    return %arg0, %arg1, %c0_i32 : i32, i32, i32
  }
  func.func @transform_3(%arg0: i32, %arg1: i32) -> (i32, i32) {
    %c0_i32 = arith.constant 0 : i32
    %c0_i32_0 = arith.constant 0 : i32
    %c0_i32_1 = arith.constant 0 : i32
    return %c0_i32, %c0_i32_0 : i32, i32
  }
  func.func @transform_4(%arg0: i32, %arg1: i32) -> (i32, i32) {
    %c0_i32 = arith.constant 0 : i32
    %c0_i32_0 = arith.constant 0 : i32
    %c0_i32_1 = arith.constant 0 : i32
    return %c0_i32, %c0_i32_0 : i32, i32
  }
  func.func @transform_5(%arg0: i32, %arg1: i32) -> (i32, i32) {
    %c0_i32 = arith.constant 0 : i32
    %c0_i32_0 = arith.constant 0 : i32
    %c0_i32_1 = arith.constant 0 : i32
    return %c0_i32, %c0_i32_0 : i32, i32
  }
  func.func @transform_6(%arg0: i32, %arg1: i32) -> (i32, i32) {
    %c0_i32 = arith.constant 0 : i32
    %c0_i32_0 = arith.constant 0 : i32
    %c0_i32_1 = arith.constant 0 : i32
    return %c0_i32, %c0_i32_0 : i32, i32
  }
  func.func @transform_7(%arg0: i32, %arg1: i32) -> (i32, i32) {
    %c0_i32 = arith.constant 0 : i32
    %c0_i32_0 = arith.constant 0 : i32
    %c0_i32_1 = arith.constant 0 : i32
    return %c0_i32, %c0_i32_0 : i32, i32
  }
  func.func @transform_8(%arg0: i32, %arg1: i32) -> (i32, i32) {
    %c0_i32 = arith.constant 0 : i32
    %c0_i32_0 = arith.constant 0 : i32
    %c0_i32_1 = arith.constant 0 : i32
    return %c0_i32, %c0_i32_0 : i32, i32
  }
  func.func @transform_9(%arg0: i32, %arg1: i32) -> (i32, i32) {
    %c0_i32 = arith.constant 0 : i32
    %c0_i32_0 = arith.constant 0 : i32
    %c0_i32_1 = arith.constant 0 : i32
    return %c0_i32, %c0_i32_0 : i32, i32
  }
  func.func @transform_10(%arg0: i32, %arg1: i32) -> (i32, i32) {
    %c0_i32 = arith.constant 0 : i32
    %c0_i32_0 = arith.constant 0 : i32
    %c0_i32_1 = arith.constant 0 : i32
    return %c0_i32, %c0_i32_0 : i32, i32
  }
  func.func @transform_11(%arg0: i32, %arg1: i32) -> (i32, i32, i32) {
    %c0_i32 = arith.constant 0 : i32
    %c0_i32_0 = arith.constant 0 : i32
    return %arg0, %arg1, %c0_i32 : i32, i32, i32
  }
}

</mosaic_0001>

<llo_original>
// kernel: tpu_custom_call.1
$region0: #{tpu_custom_call.1}
  #allocation0 [shape = 'u32[]', space=smem, size = 0x4, offset = 0x4, fixed_abs, tag = 'smem constant byte address 0x4 - core index']
  #allocation1 [shape = 'u32[144,128]{1,0:T(1,128)}', space=vmem, size = 0x12000, scoped, tag = 'internal scratch']
  #allocation2 [shape = 'bf16[8,32]{1,0:T(8,128)(2,1)}', space=vmem, size = 0x800, scoped, tag = 'scratch operand']
  #allocation3 [shape = 'bf16[8,32]{1,0:T(8,128)(2,1)}', space=vmem, size = 0x800, scoped, tag = 'scratch operand']
  %s0 = inlined_call_operand.hbm [shape: f32[2,8,32], index: 0, kind: input, shape index: {}]
  %s1 = inlined_call_operand.hbm [shape: f32[2,8,32], index: 1, kind: input, shape index: {}]
  %s2 = inlined_call_operand.hbm [shape: bf16[2,8,8], index: 2, kind: input, shape index: {}]
  %s3 = inlined_call_operand.hbm [shape: bf16[32,32], index: 3, kind: input, shape index: {}]
  %s4 = inlined_call_operand.hbm [shape: bf16[32,32], index: 4, kind: input, shape index: {}]
  %s5 = inlined_call_operand.hbm [shape: bf16[32,32], index: 5, kind: input, shape index: {}]
  %s6 = inlined_call_operand.hbm [shape: bf16[32,32], index: 6, kind: input, shape index: {}]
  %s7 = inlined_call_operand.hbm [shape: bf16[32,64], index: 7, kind: input, shape index: {}]
  %s8 = inlined_call_operand.hbm [shape: bf16[64,32], index: 8, kind: input, shape index: {}]
  %s9 = inlined_call_operand.hbm [shape: f32[9,32], index: 9, kind: input, shape index: {}]
  %s10 = inlined_call_operand.hbm [shape: f32[1,64], index: 10, kind: input, shape index: {}]
  %s11 = inlined_call_operand.hbm [shape: f32[2,8,32], index: 11, kind: output, shape index: {}]
  %s12 = sld [smem:[#allocation0]]
  $region125: #{tpu_custom_call.1} parent=0
    _
  %s14 = ssub.s32 1, %s12
  %s15 = scalar_select 0, %s14, %s12
  $region1: #{tpu_custom_call.1} parent=0
    #allocation4 [shape = 'u8[8192]{0}', space=vmem, size = 0x2000, scoped, tag = 'input window, operand 0']
    #allocation5 [shape = 's32[2]{0}', space=sflag, size = 0x8, scoped, tag = 'scoped memory for tpu_custom_call.1']
    #allocation6 [shape = 's32[2]{0}', space=sflag, size = 0x8, scoped, tag = 'scoped memory for tpu_custom_call.1']
    #allocation7 [shape = 'u8[8192]{0}', space=vmem, size = 0x2000, scoped, tag = 'input window, operand 1']
    #allocation8 [shape = 's32[2]{0}', space=sflag, size = 0x8, scoped, tag = 'scoped memory for tpu_custom_call.1']
    #allocation9 [shape = 'u8[4096]{0}', space=vmem, size = 0x1000, scoped, tag = 'input window, operand 2']
    #allocation10 [shape = 'u8[8192]{0}', space=vmem, size = 0x2000, scoped, tag = 'input window, operand 3, single buffered']
    #allocation11 [shape = 's32[1]{0}', space=sflag, size = 0x4, scoped, tag = 'scoped memory for tpu_custom_call.1']
    #allocation12 [shape = 'u8[8192]{0}', space=vmem, size = 0x2000, scoped, tag = 'input window, operand 4, single buffered']
    #allocation13 [shape = 'u8[8192]{0}', space=vmem, size = 0x2000, scoped, tag = 'input window, operand 5, single buffered']
    #allocation14 [shape = 's32[1]{0}', space=sflag, size = 0x4, scoped, tag = 'scoped memory for tpu_custom_call.1']
    #allocation15 [shape = 'u8[8192]{0}', space=vmem, size = 0x2000, scoped, tag = 'input window, operand 6, single buffered']
    #allocation16 [shape = 'u8[8192]{0}', space=vmem, size = 0x2000, scoped, tag = 'input window, operand 7, single buffered']
    #allocation17 [shape = 's32[1]{0}', space=sflag, size = 0x4, scoped, tag = 'scoped memory for tpu_custom_call.1']
    #allocation18 [shape = 'u8[16384]{0}', space=vmem, size = 0x4000, scoped, tag = 'input window, operand 8, single buffered']
    #allocation19 [shape = 'u8[8192]{0}', space=vmem, size = 0x2000, scoped, tag = 'input window, operand 9, single buffered']
    #allocation20 [shape = 's32[1]{0}', space=sflag, size = 0x4, scoped, tag = 'scoped memory for tpu_custom_call.1']
    #allocation21 [shape = 'u8[512]{0}', space=vmem, size = 0x400, scoped, tag = 'input window, operand 10, single buffered']
    #allocation22 [shape = 'u8[8192]{0}', space=vmem, size = 0x2000, scoped, tag = 'output window, operand 0']
    %16 = vsyncpa [#allocation5], 0
    %s17 = scalar_lea.sflag [#allocation5], 1
    %18 = vsyncpa %s17, 0
    %19 = vsyncpa [#allocation8], 0
    %s20 = scalar_lea.sflag [#allocation8], 1
    %21 = vsyncpa %s20, 0
    %22 = vsyncpa [#allocation11], 0
    %23 = vsyncpa [#allocation14], 0
    %24 = vsyncpa [#allocation17], 0
    %25 = vsyncpa [#allocation20], 0
    %26 = vsyncpa [#allocation6], 0
    %s27 = scalar_lea.sflag [#allocation6], 1
    %28 = vsyncpa %s27, 0
    loop: start=0, step=1, limit=4
    $region2: #{tpu_custom_call.1} parent=1 // loop_pre_header
      _
    $region3: #{tpu_custom_call.1} parent=1 // loop_header
      %s30 = sphi 0, %s34
      %p31 = scmp.ge.s32.totalorder %s30, 4
      %s37 = sphi 0, %s49
      %s38 = sphi 0, %s45
      %s39 = sphi 0, %s37
      %s40 = sphi 0, %s38
      %s41 = sphi 0, %s39
      %s42 = sphi 0, %s40
      %s54 = sphi 0, %s56
      %s57 = sphi 0, %s54
      %s58 = sphi 0, %s57
      %s74 = sphi 0, %s58
      %s80 = sphi 0, %s82
      %s83 = sphi 0, %s80
      %s84 = sphi 0, %s83
      %s100 = sphi 0, %s84
      %s108 = sphi 0, %s110
      %s111 = sphi 0, %s108
      %s112 = sphi 0, %s111
      %s128 = sphi 0, %s112
      %s132 = sphi 0, %s132
      %s134 = sphi 0, %s132
      %s135 = sphi 0, %s134
      %s149 = sphi 0, %s135
      %s153 = sphi 0, %s153
      %s155 = sphi 0, %s153
      %s156 = sphi 0, %s155
      %s170 = sphi 0, %s156
      %s174 = sphi 0, %s174
      %s176 = sphi 0, %s174
      %s177 = sphi 0, %s176
      %s191 = sphi 0, %s177
      %s195 = sphi 0, %s195
      %s197 = sphi 0, %s195
      %s198 = sphi 0, %s197
      %s212 = sphi 0, %s198
      %s216 = sphi 0, %s216
      %s218 = sphi 0, %s216
      %s219 = sphi 0, %s218
      %s233 = sphi 0, %s219
      %s237 = sphi 0, %s237
      %s239 = sphi 0, %s237
      %s240 = sphi 0, %s239
      %s254 = sphi 0, %s240
      %s258 = sphi 0, %s258
      %s260 = sphi 0, %s258
      %s261 = sphi 0, %s260
      %s275 = sphi 0, %s261
      %s279 = sphi 0, %s279
      %s281 = sphi 0, %s279
      %s282 = sphi 0, %s281
      %s296 = sphi 0, %s282
      %s304 = sphi 0, %s306
      %s307 = sphi 0, %s304
      %s308 = sphi 0, %s307
      %s324 = sphi 0, %s308
    $region4: #{tpu_custom_call.1} parent=1 // loop_header_branch
      %33 = sbr.rel (%p31) target = $region8
    $region5: #{tpu_custom_call.1} parent=1 // loop_body
      %s35 = ssub.s32 %s30, 1
      %s36 = ssub.s32 %s30, 2
      %s43 = sadd.s32 1, %s38
      %p44 = scmp.ge.s32.totalorder %s43, 1
      %s45 = scalar_select %p44, 0, %s43
      %s46 = sadd.s32 1, %s37
      %s47 = scalar_select %p44, %s46, %s37
      %p48 = scmp.ge.s32.totalorder %s47, 2
      %s49 = scalar_select %p48, 0, %s47
      %s50 = ssub.s32 %s37, %s49
      %s51 = ssub.s32 %s38, %s45
      %s52 = sor.u32 %s50, %s51
      %p53 = scmp.eq.s32.totalorder %s52, 0
      %s55 = sadd.s32 %s54, 1
      %s56 = scalar_select %p53, %s54, %s55
      %p59 = pneg %p53
      %p60 = scmp.eq.s32.totalorder %s30, 1
      %p61 = por %p59, %p60
      %p62 = scmp.ne.s32.totalorder %s54, %s57
      %p63 = scmp.eq.s32.totalorder %s30, 0
      %p64 = por %p62, %p63
      %p65 = scmp.ne.s32.totalorder %s54, %s57
      %p66 = scmp.eq.s32.totalorder %s35, 1
      %p67 = por %p65, %p66
      %p68 = scmp.ne.s32.totalorder %s57, %s58
      %p69 = scmp.eq.s32.totalorder %s35, 0
      %p70 = por %p68, %p69
      %p71 = scmp.ne.s32.totalorder %s57, %s58
      %p72 = scmp.eq.s32.totalorder %s36, 1
      %p73 = por %p71, %p72
      %p75 = scmp.ne.s32.totalorder %s58, %s74
      %p76 = scmp.eq.s32.totalorder %s36, 0
      %p77 = por %p75, %p76
      %s78 = ssub.s32 %s37, %s49
      %p79 = scmp.eq.s32.totalorder %s78, 0
      %s81 = sadd.s32 %s80, 1
      %s82 = scalar_select %p79, %s80, %s81
      %p85 = pneg %p79
      %p86 = scmp.eq.s32.totalorder %s30, 1
      %p87 = por %p85, %p86
      %p88 = scmp.ne.s32.totalorder %s80, %s83
      %p89 = scmp.eq.s32.totalorder %s30, 0
      %p90 = por %p88, %p89
      %p91 = scmp.ne.s32.totalorder %s80, %s83
      %p92 = scmp.eq.s32.totalorder %s35, 1
      %p93 = por %p91, %p92
      %p94 = scmp.ne.s32.totalorder %s83, %s84
      %p95 = scmp.eq.s32.totalorder %s35, 0
      %p96 = por %p94, %p95
      %p97 = scmp.ne.s32.totalorder %s83, %s84
      %p98 = scmp.eq.s32.totalorder %s36, 1
      %p99 = por %p97, %p98
      %p101 = scmp.ne.s32.totalorder %s84, %s100
      %p102 = scmp.eq.s32.totalorder %s36, 0
      %p103 = por %p101, %p102
      %s104 = ssub.s32 %s37, %s49
      %s105 = ssub.s32 %s38, %s45
      %s106 = sor.u32 %s104, %s105
      %p107 = scmp.eq.s32.totalorder %s106, 0
      %s109 = sadd.s32 %s108, 1
      %s110 = scalar_select %p107, %s108, %s109
      %p113 = pneg %p107
      %p114 = scmp.eq.s32.totalorder %s30, 1
      %p115 = por %p113, %p114
      %p116 = scmp.ne.s32.totalorder %s108, %s111
      %p117 = scmp.eq.s32.totalorder %s30, 0
      %p118 = por %p116, %p117
      %p119 = scmp.ne.s32.totalorder %s108, %s111
      %p120 = scmp.eq.s32.totalorder %s35, 1
      %p121 = por %p119, %p120
      %p122 = scmp.ne.s32.totalorder %s111, %s112
      %p123 = scmp.eq.s32.totalorder %s35, 0
      %p124 = por %p122, %p123
      %p125 = scmp.ne.s32.totalorder %s111, %s112
      %p126 = scmp.eq.s32.totalorder %s36, 1
      %p127 = por %p125, %p126
      %p129 = scmp.ne.s32.totalorder %s112, %s128
      %p130 = scmp.eq.s32.totalorder %s36, 0
      %p131 = por %p129, %p130
      %s133 = sadd.s32 %s132, 1
      %p136 = scmp.eq.s32.totalorder %s30, 1
      %p137 = scmp.ne.s32.totalorder %s132, %s134
      %p138 = scmp.eq.s32.totalorder %s30, 0
      %p139 = por %p137, %p138
      %p140 = scmp.ne.s32.totalorder %s132, %s134
      %p141 = scmp.eq.s32.totalorder %s35, 1
      %p142 = por %p140, %p141
      %p143 = scmp.ne.s32.totalorder %s134, %s135
      %p144 = scmp.eq.s32.totalorder %s35, 0
      %p145 = por %p143, %p144
      %p146 = scmp.ne.s32.totalorder %s134, %s135
      %p147 = scmp.eq.s32.totalorder %s36, 1
      %p148 = por %p146, %p147
      %p150 = scmp.ne.s32.totalorder %s135, %s149
      %p151 = scmp.eq.s32.totalorder %s36, 0
      %p152 = por %p150, %p151
      %s154 = sadd.s32 %s153, 1
      %p157 = scmp.eq.s32.totalorder %s30, 1
      %p158 = scmp.ne.s32.totalorder %s153, %s155
      %p159 = scmp.eq.s32.totalorder %s30, 0
      %p160 = por %p158, %p159
      %p161 = scmp.ne.s32.totalorder %s153, %s155
      %p162 = scmp.eq.s32.totalorder %s35, 1
      %p163 = por %p161, %p162
      %p164 = scmp.ne.s32.totalorder %s155, %s156
      %p165 = scmp.eq.s32.totalorder %s35, 0
      %p166 = por %p164, %p165
      %p167 = scmp.ne.s32.totalorder %s155, %s156
      %p168 = scmp.eq.s32.totalorder %s36, 1
      %p169 = por %p167, %p168
      %p171 = scmp.ne.s32.totalorder %s156, %s170
      %p172 = scmp.eq.s32.totalorder %s36, 0
      %p173 = por %p171, %p172
      %s175 = sadd.s32 %s174, 1
      %p178 = scmp.eq.s32.totalorder %s30, 1
      %p179 = scmp.ne.s32.totalorder %s174, %s176
      %p180 = scmp.eq.s32.totalorder %s30, 0
      %p181 = por %p179, %p180
      %p182 = scmp.ne.s32.totalorder %s174, %s176
      %p183 = scmp.eq.s32.totalorder %s35, 1
      %p184 = por %p182, %p183
      %p185 = scmp.ne.s32.totalorder %s176, %s177
      %p186 = scmp.eq.s32.totalorder %s35, 0
      %p187 = por %p185, %p186
      %p188 = scmp.ne.s32.totalorder %s176, %s177
      %p189 = scmp.eq.s32.totalorder %s36, 1
      %p190 = por %p188, %p189
      %p192 = scmp.ne.s32.totalorder %s177, %s191
      %p193 = scmp.eq.s32.totalorder %s36, 0
      %p194 = por %p192, %p193
      %s196 = sadd.s32 %s195, 1
      %p199 = scmp.eq.s32.totalorder %s30, 1
      %p200 = scmp.ne.s32.totalorder %s195, %s197
      %p201 = scmp.eq.s32.totalorder %s30, 0
      %p202 = por %p200, %p201
      %p203 = scmp.ne.s32.totalorder %s195, %s197
      %p204 = scmp.eq.s32.totalorder %s35, 1
      %p205 = por %p203, %p204
      %p206 = scmp.ne.s32.totalorder %s197, %s198
      %p207 = scmp.eq.s32.totalorder %s35, 0
      %p208 = por %p206, %p207
      %p209 = scmp.ne.s32.totalorder %s197, %s198
      %p210 = scmp.eq.s32.totalorder %s36, 1
      %p211 = por %p209, %p210
      %p213 = scmp.ne.s32.totalorder %s198, %s212
      %p214 = scmp.eq.s32.totalorder %s36, 0
      %p215 = por %p213, %p214
      %s217 = sadd.s32 %s216, 1
      %p220 = scmp.eq.s32.totalorder %s30, 1
      %p221 = scmp.ne.s32.totalorder %s216, %s218
      %p222 = scmp.eq.s32.totalorder %s30, 0
      %p223 = por %p221, %p222
      %p224 = scmp.ne.s32.totalorder %s216, %s218
      %p225 = scmp.eq.s32.totalorder %s35, 1
      %p226 = por %p224, %p225
      %p227 = scmp.ne.s32.totalorder %s218, %s219
      %p228 = scmp.eq.s32.totalorder %s35, 0
      %p229 = por %p227, %p228
      %p230 = scmp.ne.s32.totalorder %s218, %s219
      %p231 = scmp.eq.s32.totalorder %s36, 1
      %p232 = por %p230, %p231
      %p234 = scmp.ne.s32.totalorder %s219, %s233
      %p235 = scmp.eq.s32.totalorder %s36, 0
      %p236 = por %p234, %p235
      %s238 = sadd.s32 %s237, 1
      %p241 = scmp.eq.s32.totalorder %s30, 1
      %p242 = scmp.ne.s32.totalorder %s237, %s239
      %p243 = scmp.eq.s32.totalorder %s30, 0
      %p244 = por %p242, %p243
      %p245 = scmp.ne.s32.totalorder %s237, %s239
      %p246 = scmp.eq.s32.totalorder %s35, 1
      %p247 = por %p245, %p246
      %p248 = scmp.ne.s32.totalorder %s239, %s240
      %p249 = scmp.eq.s32.totalorder %s35, 0
      %p250 = por %p248, %p249
      %p251 = scmp.ne.s32.totalorder %s239, %s240
      %p252 = scmp.eq.s32.totalorder %s36, 1
      %p253 = por %p251, %p252
      %p255 = scmp.ne.s32.totalorder %s240, %s254
      %p256 = scmp.eq.s32.totalorder %s36, 0
      %p257 = por %p255, %p256
      %s259 = sadd.s32 %s258, 1
      %p262 = scmp.eq.s32.totalorder %s30, 1
      %p263 = scmp.ne.s32.totalorder %s258, %s260
      %p264 = scmp.eq.s32.totalorder %s30, 0
      %p265 = por %p263, %p264
      %p266 = scmp.ne.s32.totalorder %s258, %s260
      %p267 = scmp.eq.s32.totalorder %s35, 1
      %p268 = por %p266, %p267
      %p269 = scmp.ne.s32.totalorder %s260, %s261
      %p270 = scmp.eq.s32.totalorder %s35, 0
      %p271 = por %p269, %p270
      %p272 = scmp.ne.s32.totalorder %s260, %s261
      %p273 = scmp.eq.s32.totalorder %s36, 1
      %p274 = por %p272, %p273
      %p276 = scmp.ne.s32.totalorder %s261, %s275
      %p277 = scmp.eq.s32.totalorder %s36, 0
      %p278 = por %p276, %p277
      %s280 = sadd.s32 %s279, 1
      %p283 = scmp.eq.s32.totalorder %s30, 1
      %p284 = scmp.ne.s32.totalorder %s279, %s281
      %p285 = scmp.eq.s32.totalorder %s30, 0
      %p286 = por %p284, %p285
      %p287 = scmp.ne.s32.totalorder %s279, %s281
      %p288 = scmp.eq.s32.totalorder %s35, 1
      %p289 = por %p287, %p288
      %p290 = scmp.ne.s32.totalorder %s281, %s282
      %p291 = scmp.eq.s32.totalorder %s35, 0
      %p292 = por %p290, %p291
      %p293 = scmp.ne.s32.totalorder %s281, %s282
      %p294 = scmp.eq.s32.totalorder %s36, 1
      %p295 = por %p293, %p294
      %p297 = scmp.ne.s32.totalorder %s282, %s296
      %p298 = scmp.eq.s32.totalorder %s36, 0
      %p299 = por %p297, %p298
      %s300 = ssub.s32 %s37, %s49
      %s301 = ssub.s32 %s38, %s45
      %s302 = sor.u32 %s300, %s301
      %p303 = scmp.eq.s32.totalorder %s302, 0
      %s305 = sadd.s32 %s304, 1
      %s306 = scalar_select %p303, %s304, %s305
      %p309 = pneg %p303
      %p310 = scmp.eq.s32.totalorder %s30, 1
      %p311 = por %p309, %p310
      %p312 = scmp.ne.s32.totalorder %s304, %s307
      %p313 = scmp.eq.s32.totalorder %s30, 0
      %p314 = por %p312, %p313
      %p315 = scmp.ne.s32.totalorder %s304, %s307
      %p316 = scmp.eq.s32.totalorder %s35, 1
      %p317 = por %p315, %p316
      %p318 = scmp.ne.s32.totalorder %s307, %s308
      %p319 = scmp.eq.s32.totalorder %s35, 0
      %p320 = por %p318, %p319
      %p321 = scmp.ne.s32.totalorder %s307, %s308
      %p322 = scmp.eq.s32.totalorder %s36, 1
      %p323 = por %p321, %p322
      %p325 = scmp.ne.s32.totalorder %s308, %s324
      %p326 = scmp.eq.s32.totalorder %s36, 0
      %p327 = por %p325, %p326
      %p328 = scmp.le.s32.totalorder 1, %s30
      %p329 = scmp.lt.s32.totalorder %s30, 3
      %p330 = pnand %p328, %p329
      %p331 = pneg %p330
      // Predicated region
      $region9: #{tpu_custom_call.1} parent=5 // pred_check
        _
      $region10: #{tpu_custom_call.1} parent=5 // pred_check_branch
        %333 = sbr.rel (%p330) target = $region12
      $region11: #{tpu_custom_call.1} parent=5 // pred_region
        %s334 = ssub.s32 %s30, 1
        // Predicated region
        $region13: #{tpu_custom_call.1} parent=11 // pred_check
          %p335 = pneg %p145
        $region14: #{tpu_custom_call.1} parent=11 // pred_check_branch
          %337 = sbr.rel (%p335) target = $region16
        $region15: #{tpu_custom_call.1} parent=11 // pred_region
          %s339 = ssub.s32 256, 256
          %340 = vsyncadd [#allocation11], %s339
          %s341 = sshll.u32 [#allocation10], 4
          %s342 = int_to_ptr.vmem [resolvable:$true] %s341
          %347 = dma.hbm_to_vmem [thread:$0]  %s3, 256, %s342, [#allocation11], 64, 64, 4
        $region16: #{tpu_custom_call.1} parent=11 // pred_fallthru
          _
        // Predicated region
        $region17: #{tpu_custom_call.1} parent=11 // pred_check
          %p348 = pneg %p166
        $region18: #{tpu_custom_call.1} parent=11 // pred_check_branch
          %350 = sbr.rel (%p348) target = $region20
        $region19: #{tpu_custom_call.1} parent=11 // pred_region
          %s352 = ssub.s32 256, 256
          %353 = vsyncadd [#allocation11], %s352
          %s354 = sshll.u32 [#allocation12], 4
          %s355 = int_to_ptr.vmem [resolvable:$true] %s354
          %360 = dma.hbm_to_vmem [thread:$0]  %s4, 256, %s355, [#allocation11], 64, 64, 4
        $region20: #{tpu_custom_call.1} parent=11 // pred_fallthru
          _
        // Predicated region
        $region21: #{tpu_custom_call.1} parent=11 // pred_check
          %p361 = pneg %p187
        $region22: #{tpu_custom_call.1} parent=11 // pred_check_branch
          %363 = sbr.rel (%p361) target = $region24
        $region23: #{tpu_custom_call.1} parent=11 // pred_region
          %s365 = ssub.s32 256, 256
          %366 = vsyncadd [#allocation14], %s365
          %s367 = sshll.u32 [#allocation13], 4
          %s368 = int_to_ptr.vmem [resolvable:$true] %s367
          %373 = dma.hbm_to_vmem [thread:$0]  %s5, 256, %s368, [#allocation14], 64, 64, 4
        $region24: #{tpu_custom_call.1} parent=11 // pred_fallthru
          _
        // Predicated region
        $region25: #{tpu_custom_call.1} parent=11 // pred_check
          %p374 = pneg %p208
        $region26: #{tpu_custom_call.1} parent=11 // pred_check_branch
          %376 = sbr.rel (%p374) target = $region28
        $region27: #{tpu_custom_call.1} parent=11 // pred_region
          %s378 = ssub.s32 256, 256
          %379 = vsyncadd [#allocation14], %s378
          %s380 = sshll.u32 [#allocation15], 4
          %s381 = int_to_ptr.vmem [resolvable:$true] %s380
          %386 = dma.hbm_to_vmem [thread:$0]  %s6, 256, %s381, [#allocation14], 64, 64, 4
        $region28: #{tpu_custom_call.1} parent=11 // pred_fallthru
          _
        // Predicated region
        $region29: #{tpu_custom_call.1} parent=11 // pred_check
          %p387 = pneg %p229
        $region30: #{tpu_custom_call.1} parent=11 // pred_check_branch
          %389 = sbr.rel (%p387) target = $region32
        $region31: #{tpu_custom_call.1} parent=11 // pred_region
          %s391 = ssub.s32 256, 256
          %392 = vsyncadd [#allocation17], %s391
          %s393 = sshll.u32 [#allocation16], 4
          %s394 = int_to_ptr.vmem [resolvable:$true] %s393
          %399 = dma.hbm_to_vmem [thread:$0]  %s7, 256, %s394, [#allocation17], 64, 64, 4
        $region32: #{tpu_custom_call.1} parent=11 // pred_fallthru
          _
        // Predicated region
        $region33: #{tpu_custom_call.1} parent=11 // pred_check
          %p400 = pneg %p250
        $region34: #{tpu_custom_call.1} parent=11 // pred_check_branch
          %402 = sbr.rel (%p400) target = $region36
        $region35: #{tpu_custom_call.1} parent=11 // pred_region
          %s404 = ssub.s32 512, 512
          %405 = vsyncadd [#allocation17], %s404
          %s406 = sshll.u32 [#allocation18], 4
          %s407 = int_to_ptr.vmem [resolvable:$true] %s406
          %412 = dma.hbm_to_vmem [thread:$0]  %s8, 512, %s407, [#allocation17], 64, 64, 4
        $region36: #{tpu_custom_call.1} parent=11 // pred_fallthru
          _
        // Predicated region
        $region37: #{tpu_custom_call.1} parent=11 // pred_check
          %p413 = pneg %p271
        $region38: #{tpu_custom_call.1} parent=11 // pred_check_branch
          %415 = sbr.rel (%p413) target = $region40
        $region39: #{tpu_custom_call.1} parent=11 // pred_region
          %s417 = ssub.s32 256, 256
          %418 = vsyncadd [#allocation20], %s417
          %s419 = sshll.u32 [#allocation19], 4
          %s420 = int_to_ptr.vmem [resolvable:$true] %s419
          %425 = dma.hbm_to_vmem [thread:$0]  %s9, 256, %s420, [#allocation20], 128, 128, 8
        $region40: #{tpu_custom_call.1} parent=11 // pred_fallthru
          _
        // Predicated region
        $region41: #{tpu_custom_call.1} parent=11 // pred_check
          %p426 = pneg %p292
        $region42: #{tpu_custom_call.1} parent=11 // pred_check_branch
          %428 = sbr.rel (%p426) target = $region44
        $region43: #{tpu_custom_call.1} parent=11 // pred_region
          %s430 = ssub.s32 16, 16
          %431 = vsyncadd [#allocation20], %s430
          %s433 = sshll.u32 [#allocation21], 4
          %s434 = int_to_ptr.vmem [resolvable:$true] %s433
          %436 = dma.hbm_to_vmem [thread:$0]  %s10, 16, %s434, [#allocation20]
        $region44: #{tpu_custom_call.1} parent=11 // pred_fallthru
          _
      $region12: #{tpu_custom_call.1} parent=5 // pred_fallthru
        _
      %p437 = scmp.lt.s32.totalorder %s30, 2
      // Predicated region
      $region45: #{tpu_custom_call.1} parent=5 // pred_check
        %p438 = pneg %p437
      $region46: #{tpu_custom_call.1} parent=5 // pred_check_branch
        %440 = sbr.rel (%p438) target = $region48
      $region47: #{tpu_custom_call.1} parent=5 // pred_region
        // Predicated region
        $region49: #{tpu_custom_call.1} parent=47 // pred_check
          %p441 = pneg %p64
        $region50: #{tpu_custom_call.1} parent=47 // pred_check_branch
          %443 = sbr.rel (%p441) target = $region52
        $region51: #{tpu_custom_call.1} parent=47 // pred_region
          %s444 = sand.u32 %s54, 1
          %s445 = scalar_lea.sflag [#allocation5], %s444
          %s446 = sand.u32 %s54, 1
          %s447 = smul.addr %s446, 8
          %s448 = scalar_lea.vmem [#allocation4], %s447
          %s450 = ssub.s32 128, 128
          %451 = vsyncadd %s445, %s450
          %s452 = sadd.s32 %s38, %s37
          %s453 = smul.addr %s452, 128
          %s454 = scalar_lea.hbm %s0, %s453
          %s456 = sshll.u32 %s448, 4
          %s457 = int_to_ptr.vmem [resolvable:$true] %s456
          %459 = dma.hbm_to_vmem [thread:$0]  %s454, 128, %s457, %s445
        $region52: #{tpu_custom_call.1} parent=47 // pred_fallthru
          _
        // Predicated region
        $region53: #{tpu_custom_call.1} parent=47 // pred_check
          %p460 = pneg %p90
        $region54: #{tpu_custom_call.1} parent=47 // pred_check_branch
          %462 = sbr.rel (%p460) target = $region56
        $region55: #{tpu_custom_call.1} parent=47 // pred_region
          %s463 = sand.u32 %s30, 1
          %s464 = scalar_lea.sflag [#allocation8], %s463
          %s465 = sand.u32 %s80, 1
          %s466 = smul.addr %s465, 8
          %s467 = scalar_lea.vmem [#allocation7], %s466
          %s469 = ssub.s32 128, 128
          %470 = vsyncadd %s464, %s469
          %s471 = smul.addr %s37, 128
          %s472 = scalar_lea.hbm %s1, %s471
          %s474 = sshll.u32 %s467, 4
          %s475 = int_to_ptr.vmem [resolvable:$true] %s474
          %477 = dma.hbm_to_vmem [thread:$0]  %s472, 128, %s475, %s464
        $region56: #{tpu_custom_call.1} parent=47 // pred_fallthru
          _
        // Predicated region
        $region57: #{tpu_custom_call.1} parent=47 // pred_check
          %p478 = pneg %p118
        $region58: #{tpu_custom_call.1} parent=47 // pred_check_branch
          %480 = sbr.rel (%p478) target = $region60
        $region59: #{tpu_custom_call.1} parent=47 // pred_region
          %s481 = sand.u32 %s30, 1
          %s482 = scalar_lea.sflag [#allocation8], %s481
          %s483 = sand.u32 %s108, 1
          %s484 = smul.addr %s483, 4
          %s485 = scalar_lea.vmem [#allocation9], %s484
          %s487 = ssub.s32 64, 64
          %488 = vsyncadd %s482, %s487
          %s489 = sadd.s32 %s38, %s37
          %s490 = smul.addr %s489, 64
          %s491 = scalar_lea.hbm %s2, %s490
          %s493 = sshll.u32 %s485, 4
          %s494 = int_to_ptr.vmem [resolvable:$true] %s493
          %496 = dma.hbm_to_vmem [thread:$0]  %s491, 64, %s494, %s482
        $region60: #{tpu_custom_call.1} parent=47 // pred_fallthru
          _
      $region48: #{tpu_custom_call.1} parent=5 // pred_fallthru
        _
      %p497 = scmp.le.s32.totalorder 1, %s30
      %p498 = scmp.lt.s32.totalorder %s30, 3
      %p499 = pnand %p497, %p498
      %p500 = pneg %p499
      // Predicated region
      $region61: #{tpu_custom_call.1} parent=5 // pred_check
        _
      $region62: #{tpu_custom_call.1} parent=5 // pred_check_branch
        %502 = sbr.rel (%p499) target = $region64
      $region63: #{tpu_custom_call.1} parent=5 // pred_region
        %s503 = ssub.s32 %s30, 1
        %s504 = sand.u32 %s57, 1
        %s505 = scalar_lea.sflag [#allocation5], %s504
        %s506 = sand.u32 %s57, 1
        %s507 = smul.addr %s506, 8
        %s508 = scalar_lea.vmem [#allocation4], %s507
        // Predicated region
        $region65: #{tpu_custom_call.1} parent=63 // pred_check
          %p509 = pneg %p70
        $region66: #{tpu_custom_call.1} parent=63 // pred_check_branch
          %511 = sbr.rel (%p509) target = $region68
        $region67: #{tpu_custom_call.1} parent=63 // pred_region
          %512 = dma.done %s505, 128
        $region68: #{tpu_custom_call.1} parent=63 // pred_fallthru
          _
        %s513 = sand.u32 %s35, 1
        %s514 = scalar_lea.sflag [#allocation8], %s513
        %s515 = sand.u32 %s83, 1
        %s516 = smul.addr %s515, 8
        %s517 = scalar_lea.vmem [#allocation7], %s516
        // Predicated region
        $region69: #{tpu_custom_call.1} parent=63 // pred_check
          %p518 = pneg %p96
        $region70: #{tpu_custom_call.1} parent=63 // pred_check_branch
          %520 = sbr.rel (%p518) target = $region72
        $region71: #{tpu_custom_call.1} parent=63 // pred_region
          %521 = dma.done %s514, 128
        $region72: #{tpu_custom_call.1} parent=63 // pred_fallthru
          _
        %s522 = sand.u32 %s35, 1
        %s523 = scalar_lea.sflag [#allocation8], %s522
        %s524 = sand.u32 %s111, 1
        %s525 = smul.addr %s524, 4
        %s526 = scalar_lea.vmem [#allocation9], %s525
        // Predicated region
        $region73: #{tpu_custom_call.1} parent=63 // pred_check
          %p527 = pneg %p124
        $region74: #{tpu_custom_call.1} parent=63 // pred_check_branch
          %529 = sbr.rel (%p527) target = $region76
        $region75: #{tpu_custom_call.1} parent=63 // pred_region
          %530 = dma.done %s523, 64
        $region76: #{tpu_custom_call.1} parent=63 // pred_fallthru
          _
        // Predicated region
        $region77: #{tpu_custom_call.1} parent=63 // pred_check
          %p531 = pneg %p145
        $region78: #{tpu_custom_call.1} parent=63 // pred_check_branch
          %533 = sbr.rel (%p531) target = $region80
        $region79: #{tpu_custom_call.1} parent=63 // pred_region
          %534 = dma.done [#allocation11], 256
        $region80: #{tpu_custom_call.1} parent=63 // pred_fallthru
          _
        // Predicated region
        $region81: #{tpu_custom_call.1} parent=63 // pred_check
          %p535 = pneg %p166
        $region82: #{tpu_custom_call.1} parent=63 // pred_check_branch
          %537 = sbr.rel (%p535) target = $region84
        $region83: #{tpu_custom_call.1} parent=63 // pred_region
          %538 = dma.done [#allocation11], 256
        $region84: #{tpu_custom_call.1} parent=63 // pred_fallthru
          _
        // Predicated region
        $region85: #{tpu_custom_call.1} parent=63 // pred_check
          %p539 = pneg %p187
        $region86: #{tpu_custom_call.1} parent=63 // pred_check_branch
          %541 = sbr.rel (%p539) target = $region88
        $region87: #{tpu_custom_call.1} parent=63 // pred_region
          %542 = dma.done [#allocation14], 256
        $region88: #{tpu_custom_call.1} parent=63 // pred_fallthru
          _
        // Predicated region
        $region89: #{tpu_custom_call.1} parent=63 // pred_check
          %p543 = pneg %p208
        $region90: #{tpu_custom_call.1} parent=63 // pred_check_branch
          %545 = sbr.rel (%p543) target = $region92
        $region91: #{tpu_custom_call.1} parent=63 // pred_region
          %546 = dma.done [#allocation14], 256
        $region92: #{tpu_custom_call.1} parent=63 // pred_fallthru
          _
        // Predicated region
        $region93: #{tpu_custom_call.1} parent=63 // pred_check
          %p547 = pneg %p229
        $region94: #{tpu_custom_call.1} parent=63 // pred_check_branch
          %549 = sbr.rel (%p547) target = $region96
        $region95: #{tpu_custom_call.1} parent=63 // pred_region
          %550 = dma.done [#allocation17], 256
        $region96: #{tpu_custom_call.1} parent=63 // pred_fallthru
          _
        // Predicated region
        $region97: #{tpu_custom_call.1} parent=63 // pred_check
          %p551 = pneg %p250
        $region98: #{tpu_custom_call.1} parent=63 // pred_check_branch
          %553 = sbr.rel (%p551) target = $region100
        $region99: #{tpu_custom_call.1} parent=63 // pred_region
          %554 = dma.done [#allocation17], 512
        $region100: #{tpu_custom_call.1} parent=63 // pred_fallthru
          _
        // Predicated region
        $region101: #{tpu_custom_call.1} parent=63 // pred_check
          %p555 = pneg %p271
        $region102: #{tpu_custom_call.1} parent=63 // pred_check_branch
          %557 = sbr.rel (%p555) target = $region104
        $region103: #{tpu_custom_call.1} parent=63 // pred_region
          %558 = dma.done [#allocation20], 256
        $region104: #{tpu_custom_call.1} parent=63 // pred_fallthru
          _
        // Predicated region
        $region105: #{tpu_custom_call.1} parent=63 // pred_check
          %p559 = pneg %p292
        $region106: #{tpu_custom_call.1} parent=63 // pred_check_branch
          %561 = sbr.rel (%p559) target = $region108
        $region107: #{tpu_custom_call.1} parent=63 // pred_region
          %562 = dma.done [#allocation20], 16
        $region108: #{tpu_custom_call.1} parent=63 // pred_fallthru
          _
        %s563 = sand.u32 %s57, 1
        %s564 = scalar_lea.sflag [#allocation5], %s563
        %s565 = sand.u32 %s57, 1
        %s566 = smul.addr %s565, 8
        %s567 = scalar_lea.vmem [#allocation4], %s566
        %p568 = pneg %p70
        %p569 = pneg %p67
        %s570 = sand.u32 %s35, 1
        %s571 = scalar_lea.sflag [#allocation8], %s570
        %s572 = sand.u32 %s83, 1
        %s573 = smul.addr %s572, 8
        %s574 = scalar_lea.vmem [#allocation7], %s573
        %p575 = pneg %p96
        %p576 = pneg %p93
        %s577 = sand.u32 %s35, 1
        %s578 = scalar_lea.sflag [#allocation8], %s577
        %s579 = sand.u32 %s111, 1
        %s580 = smul.addr %s579, 4
        %s581 = scalar_lea.vmem [#allocation9], %s580
        %p582 = pneg %p124
        %p583 = pneg %p121
        %p584 = pneg %p145
        %p585 = pneg %p142
        %p586 = pneg %p166
        %p587 = pneg %p163
        %p588 = pneg %p187
        %p589 = pneg %p184
        %p590 = pneg %p208
        %p591 = pneg %p205
        %p592 = pneg %p229
        %p593 = pneg %p226
        %p594 = pneg %p250
        %p595 = pneg %p247
        %p596 = pneg %p271
        %p597 = pneg %p268
        %p598 = pneg %p292
        %p599 = pneg %p289
        %p600 = pneg %p320
        %p601 = pneg %p317
        %s602 = sand.u32 %s307, 1
        %s603 = scalar_lea.sflag [#allocation6], %s602
        %s604 = sand.u32 %s307, 1
        %s605 = smul.addr %s604, 8
        %s606 = scalar_lea.vmem [#allocation22], %s605
        %v608 = vld [vmem:[#allocation19] sm:$0xff]
        %v609 = vld [vmem:[#allocation19 + $0x8] sm:$0x1]
        %p610 = scmp.eq.s32.totalorder %s40, 0
        // Predicated region
        $region109: #{tpu_custom_call.1} parent=63 // pred_check
          %p611 = pneg %p610
        $region110: #{tpu_custom_call.1} parent=63 // pred_check_branch
          %613 = sbr.rel (%p611) target = $region112
        $region111: #{tpu_custom_call.1} parent=63 // pred_region
          %v614 = vld [vmem:[%s517] sm:$0xff]
          %v615 = vpack.c.bf16 %v614, %v614
          %v616 = vld [vmem:[#allocation12] sm:$0xf]
          %v617 = vld [vmem:[#allocation12 + $0x4] sm:$0xf]
          %v618 = vld [vmem:[#allocation12 + $0x8] sm:$0xf]
          %v619 = vld [vmem:[#allocation12 + $0xc] sm:$0xf]
          %v620 = vlaneseq
          %v621 = vshrl.u32 %v620, 7
          %v622 = vsub.s32 1, %v621
          %v623 = vrot.slane %v608, %v622
          %v628 = vunpack.c.l.b16 %v616
          %v629 = vunpack.c.l.b16 %v617
          %v630 = vunpack.c.l.b16 %v618
          %v631 = vunpack.c.l.b16 %v619
          %v632 = vpack.c.b16 %v629, %v628
          %v633 = vpack.c.b16 %v631, %v630
          %vm636 = vcmask 261120
          %v638 = vsel %vm636, %v615, 0
          %640 = vmatprep.subr.bf16.mxu0 0
          %641 = vmatpush1.bf16.msra.mxu0 %v632
          %642 = vmatprep.subr.bf16.mxu0 0
          %643 = vmatpush1.bf16.msra.mxu0 %v633
          %644 = vmatprep.subr.bf16.mxu0 0
          %645 = vmatpush1.bf16.msra.mxu0 0
          %646 = vmatprep.subr.bf16.mxu0 0
          %647 = vmatpush1.bf16.msra.mxu0 0
          %648 = vmatprep.subr.bf16.mxu0 0
          %649 = vmatpush1.bf16.msra.mxu0 0
          %650 = vmatprep.subr.bf16.mxu0 0
          %651 = vmatpush1.bf16.msra.mxu0 0
          %652 = vmatprep.subr.bf16.mxu0 0
          %653 = vmatpush1.bf16.msra.mxu0 0
          %654 = vmatprep.subr.bf16.mxu0 0
          %655 = vmatpush1.bf16.msra.mxu0 0
          %656 = vmatprep.subr.bf16.mxu0 0
          %657 = vmatpush1.bf16.msra.mxu0 0
          %658 = vmatprep.subr.bf16.mxu0 0
          %659 = vmatpush1.bf16.msra.mxu0 0
          %660 = vmatprep.subr.bf16.mxu0 0
          %661 = vmatpush1.bf16.msra.mxu0 0
          %662 = vmatprep.subr.bf16.mxu0 0
          %663 = vmatpush1.bf16.msra.mxu0 0
          %664 = vmatprep.subr.bf16.mxu0 0
          %665 = vmatpush1.bf16.msra.mxu0 0
          %666 = vmatprep.subr.bf16.mxu0 0
          %667 = vmatpush1.bf16.msra.mxu0 0
          %668 = vmatprep.subr.bf16.mxu0 0
          %669 = vmatpush1.bf16.msra.mxu0 0
          %670 = vmatprep.subr.bf16.mxu0 0
          %671 = vmatpush1.bf16.msra.mxu0 0
          %672 = vmatprep.mubr.bf16.mxu0 0
          %673 = vmatmul.mubr.bf16.gmra.mrb[0].mxu0 %v638
          %v674 = vpop.f32.mrb[0].mxu0
          %v675 = vadd.f32 %v623, %v674
          %v676 = vpop.f32.mrb[0].mxu0
          %v677 = vpop.f32.mrb[0].mxu0
          %v678 = vpop.f32.mrb[0].mxu0
          %679 = vdwg.mxu0
          %v680 = vld [vmem:[#allocation13] sm:$0xf]
          %v681 = vld [vmem:[#allocation13 + $0x4] sm:$0xf]
          %v682 = vld [vmem:[#allocation13 + $0x8] sm:$0xf]
          %v683 = vld [vmem:[#allocation13 + $0xc] sm:$0xf]
          %v684 = vlaneseq
          %v685 = vshrl.u32 %v684, 7
          %v686 = vsub.s32 2, %v685
          %v687 = vrot.slane %v608, %v686
          %v692 = vunpack.c.l.b16 %v680
          %v693 = vunpack.c.l.b16 %v681
          %v694 = vunpack.c.l.b16 %v682
          %v695 = vunpack.c.l.b16 %v683
          %v696 = vpack.c.b16 %v693, %v692
          %v697 = vpack.c.b16 %v695, %v694
          %700 = vmatprep.subr.bf16.mxu0 0
          %701 = vmatpush1.bf16.msra.mxu0 %v696
          %702 = vmatprep.subr.bf16.mxu0 0
          %703 = vmatpush1.bf16.msra.mxu0 %v697
          %704 = vmatprep.subr.bf16.mxu0 0
          %705 = vmatpush1.bf16.msra.mxu0 0
          %706 = vmatprep.subr.bf16.mxu0 0
          %707 = vmatpush1.bf16.msra.mxu0 0
          %708 = vmatprep.subr.bf16.mxu0 0
          %709 = vmatpush1.bf16.msra.mxu0 0
          %710 = vmatprep.subr.bf16.mxu0 0
          %711 = vmatpush1.bf16.msra.mxu0 0
          %712 = vmatprep.subr.bf16.mxu0 0
          %713 = vmatpush1.bf16.msra.mxu0 0
          %714 = vmatprep.subr.bf16.mxu0 0
          %715 = vmatpush1.bf16.msra.mxu0 0
          %716 = vmatprep.subr.bf16.mxu0 0
          %717 = vmatpush1.bf16.msra.mxu0 0
          %718 = vmatprep.subr.bf16.mxu0 0
          %719 = vmatpush1.bf16.msra.mxu0 0
          %720 = vmatprep.subr.bf16.mxu0 0
          %721 = vmatpush1.bf16.msra.mxu0 0
          %722 = vmatprep.subr.bf16.mxu0 0
          %723 = vmatpush1.bf16.msra.mxu0 0
          %724 = vmatprep.subr.bf16.mxu0 0
          %725 = vmatpush1.bf16.msra.mxu0 0
          %726 = vmatprep.subr.bf16.mxu0 0
          %727 = vmatpush1.bf16.msra.mxu0 0
          %728 = vmatprep.subr.bf16.mxu0 0
          %729 = vmatpush1.bf16.msra.mxu0 0
          %730 = vmatprep.subr.bf16.mxu0 0
          %731 = vmatpush1.bf16.msra.mxu0 0
          %732 = vmatprep.mubr.bf16.mxu0 0
          %733 = vmatmul.mubr.bf16.gmra.mrb[0].mxu0 %v638
          %v734 = vpop.f32.mrb[0].mxu0
          %v735 = vadd.f32 %v687, %v734
          %v736 = vpop.f32.mrb[0].mxu0
          %v737 = vpop.f32.mrb[0].mxu0
          %v738 = vpop.f32.mrb[0].mxu0
          %739 = vdwg.mxu0
          %v740 = vpack.c.bf16 %v675, %v675
          %vm741 = vcmask 257024
          %742 = vst.msk [vmem:[#allocation2] sm:$0xf] %vm741, %v740
          %v743 = vpack.c.bf16 %v735, %v735
          %744 = vst.msk [vmem:[#allocation3] sm:$0xf] %vm741, %v743
        $region112: #{tpu_custom_call.1} parent=63 // pred_fallthru
          _
        %v745 = vld [vmem:[%s508] sm:$0xff]
        %v746 = vpack.c.bf16 %v745, %v745
        %v747 = vld [vmem:[#allocation10] sm:$0xf]
        %v748 = vld [vmem:[#allocation10 + $0x4] sm:$0xf]
        %v749 = vld [vmem:[#allocation10 + $0x8] sm:$0xf]
        %v750 = vld [vmem:[#allocation10 + $0xc] sm:$0xf]
        %v751 = vlaneseq
        %v752 = vshrl.u32 %v751, 7
        %v753 = vsub.s32 0, %v752
        %v754 = vrot.slane %v608, %v753
        %v759 = vunpack.c.l.b16 %v747
        %v760 = vunpack.c.l.b16 %v748
        %v761 = vunpack.c.l.b16 %v749
        %v762 = vunpack.c.l.b16 %v750
        %v763 = vpack.c.b16 %v760, %v759
        %v764 = vpack.c.b16 %v762, %v761
        %vm767 = vcmask 261120
        %v769 = vsel %vm767, %v746, 0
        %771 = vmatprep.subr.bf16.mxu0 0
        %772 = vmatpush1.bf16.msra.mxu0 %v763
        %773 = vmatprep.subr.bf16.mxu0 0
        %774 = vmatpush1.bf16.msra.mxu0 %v764
        %775 = vmatprep.subr.bf16.mxu0 0
        %776 = vmatpush1.bf16.msra.mxu0 0
        %777 = vmatprep.subr.bf16.mxu0 0
        %778 = vmatpush1.bf16.msra.mxu0 0
        %779 = vmatprep.subr.bf16.mxu0 0
        %780 = vmatpush1.bf16.msra.mxu0 0
        %781 = vmatprep.subr.bf16.mxu0 0
        %782 = vmatpush1.bf16.msra.mxu0 0
        %783 = vmatprep.subr.bf16.mxu0 0
        %784 = vmatpush1.bf16.msra.mxu0 0
        %785 = vmatprep.subr.bf16.mxu0 0
        %786 = vmatpush1.bf16.msra.mxu0 0
        %787 = vmatprep.subr.bf16.mxu0 0
        %788 = vmatpush1.bf16.msra.mxu0 0
        %789 = vmatprep.subr.bf16.mxu0 0
        %790 = vmatpush1.bf16.msra.mxu0 0
        %791 = vmatprep.subr.bf16.mxu0 0
        %792 = vmatpush1.bf16.msra.mxu0 0
        %793 = vmatprep.subr.bf16.mxu0 0
        %794 = vmatpush1.bf16.msra.mxu0 0
        %795 = vmatprep.subr.bf16.mxu0 0
        %796 = vmatpush1.bf16.msra.mxu0 0
        %797 = vmatprep.subr.bf16.mxu0 0
        %798 = vmatpush1.bf16.msra.mxu0 0
        %799 = vmatprep.subr.bf16.mxu0 0
        %800 = vmatpush1.bf16.msra.mxu0 0
        %801 = vmatprep.subr.bf16.mxu0 0
        %802 = vmatpush1.bf16.msra.mxu0 0
        %803 = vmatprep.mubr.bf16.mxu0 0
        %804 = vmatmul.mubr.bf16.gmra.mrb[0].mxu0 %v769
        %v805 = vpop.f32.mrb[0].mxu0
        %v806 = vadd.f32 %v754, %v805
        %v807 = vpop.f32.mrb[0].mxu0
        %v808 = vpop.f32.mrb[0].mxu0
        %v809 = vpop.f32.mrb[0].mxu0
        %810 = vdwg.mxu0
        %v811 = vpack.c.bf16 %v806, %v806
        %813 = vrot.lane.b32.xlu0 %v811, 120
        %v814 = vpop.permute.xlu0 %813
        %815 = vrot.lane.b32.xlu0 %v811, 112
        %v816 = vpop.permute.xlu0 %815
        %817 = vrot.lane.b32.xlu0 %v811, 104
        %v818 = vpop.permute.xlu0 %817
        %v820 = vunpack.c.l.s4 1983009808
        %v821 = vunpack.c.0.s8 %v820
        %v822 = vlaneseq
        %v823 = vshrl.u32 %v822, 7
        %v824 = vsub.s32 %v821, %v823
        %v825 = vrot.slane %v811, %v824
        %v828 = vunpack.c.l.s4 1983009808
        %v829 = vunpack.c.0.s8 %v828
        %v830 = vlaneseq
        %v831 = vshrl.u32 %v830, 7
        %v832 = vsub.s32 %v829, %v831
        %v833 = vrot.slane %v816, %v832
        %v834 = vcombine.low %v825, %v833
        %v835 = vcombine.high %v825, %v833
        %v837 = vunpack.c.l.s4 1934713408
        %v838 = vunpack.c.0.s8 %v837
        %v839 = vlaneseq
        %v840 = vshrl.u32 %v839, 7
        %v841 = vsub.s32 %v838, %v840
        %v842 = vrot.slane %v834, %v841
        %v844 = vunpack.c.l.s4 1934713408
        %v845 = vunpack.c.0.s8 %v844
        %v846 = vlaneseq
        %v847 = vshrl.u32 %v846, 7
        %v848 = vsub.s32 %v845, %v847
        %v849 = vrot.slane %v835, %v848
        %v850 = vcombine.high %v842, 0
        %v851 = vcombine.high %v849, 0
        %v854 = vunpack.c.l.s4 1983009808
        %v855 = vunpack.c.0.s8 %v854
        %v856 = vlaneseq
        %v857 = vshrl.u32 %v856, 7
        %v858 = vsub.s32 %v855, %v857
        %v859 = vrot.slane %v814, %v858
        %v862 = vunpack.c.l.s4 1983009808
        %v863 = vunpack.c.0.s8 %v862
        %v864 = vlaneseq
        %v865 = vshrl.u32 %v864, 7
        %v866 = vsub.s32 %v863, %v865
        %v867 = vrot.slane %v818, %v866
        %v868 = vcombine.low %v859, %v867
        %v869 = vcombine.high %v859, %v867
        %v871 = vunpack.c.l.s4 1934713408
        %v872 = vunpack.c.0.s8 %v871
        %v873 = vlaneseq
        %v874 = vshrl.u32 %v873, 7
        %v875 = vsub.s32 %v872, %v874
        %v876 = vrot.slane %v868, %v875
        %v878 = vunpack.c.l.s4 1934713408
        %v879 = vunpack.c.0.s8 %v878
        %v880 = vlaneseq
        %v881 = vshrl.u32 %v880, 7
        %v882 = vsub.s32 %v879, %v881
        %v883 = vrot.slane %v869, %v882
        %v884 = vcombine.high %v876, 0
        %v885 = vcombine.high %v883, 0
        %v888 = vpack.i.b16 %v876, %v842
        %v890 = vshrl.u32 %v842, 16
        %v891 = vshrl.u32 %v876, 16
        %v892 = vpack.i.b16 %v891, %v890
        %v896 = vpack.i.b16 %v884, %v850
        %v898 = vshrl.u32 %v850, 16
        %v899 = vshrl.u32 %v884, 16
        %v900 = vpack.i.b16 %v899, %v898
        %v904 = vpack.i.b16 %v883, %v849
        %v906 = vshrl.u32 %v849, 16
        %v907 = vshrl.u32 %v883, 16
        %v908 = vpack.i.b16 %v907, %v906
        %v912 = vpack.i.b16 %v885, %v851
        %v914 = vshrl.u32 %v851, 16
        %v915 = vshrl.u32 %v885, 16
        %v916 = vpack.i.b16 %v915, %v914
        %v918 = vcombine.low %v888, %v904
        %v920 = vunpack.c.l.s4 1983009808
        %v921 = vunpack.c.0.s8 %v920
        %v922 = vlaneseq
        %v923 = vshrl.u32 %v922, 7
        %v924 = vsub.s32 %v921, %v923
        %v925 = vrot.slane %v918, %v924
        %v926 = vcombine.low %v896, %v912
        %v928 = vunpack.c.l.s4 1983009808
        %v929 = vunpack.c.0.s8 %v928
        %v930 = vlaneseq
        %v931 = vshrl.u32 %v930, 7
        %v932 = vsub.s32 %v929, %v931
        %v933 = vrot.slane %v926, %v932
        %v934 = vcombine.low %v925, %v933
        %v936 = vunpack.c.l.s4 1934713408
        %v937 = vunpack.c.0.s8 %v936
        %v938 = vlaneseq
        %v939 = vshrl.u32 %v938, 7
        %v940 = vsub.s32 %v937, %v939
        %v941 = vrot.slane %v934, %v940
        %v942 = vcombine.high %v941, 0
        %v943 = vcombine.low %v892, %v908
        %v945 = vunpack.c.l.s4 1983009808
        %v946 = vunpack.c.0.s8 %v945
        %v947 = vlaneseq
        %v948 = vshrl.u32 %v947, 7
        %v949 = vsub.s32 %v946, %v948
        %v950 = vrot.slane %v943, %v949
        %v951 = vcombine.low %v900, %v916
        %v953 = vunpack.c.l.s4 1983009808
        %v954 = vunpack.c.0.s8 %v953
        %v955 = vlaneseq
        %v956 = vshrl.u32 %v955, 7
        %v957 = vsub.s32 %v954, %v956
        %v958 = vrot.slane %v951, %v957
        %v959 = vcombine.low %v950, %v958
        %v961 = vunpack.c.l.s4 1934713408
        %v962 = vunpack.c.0.s8 %v961
        %v963 = vlaneseq
        %v964 = vshrl.u32 %v963, 7
        %v965 = vsub.s32 %v962, %v964
        %v966 = vrot.slane %v959, %v965
        %v967 = vcombine.high %v966, 0
        %v970 = vpack.i.b16 %v966, %v941
        %v971 = vshrl.u32 %v941, 16
        %v972 = vshrl.u32 %v966, 16
        %v973 = vpack.i.b16 %v972, %v971
        %v976 = vpack.i.b16 %v967, %v942
        %v977 = vshrl.u32 %v942, 16
        %v978 = vshrl.u32 %v967, 16
        %v979 = vpack.i.b16 %v978, %v977
        %v980 = vld [vmem:[#allocation2] sm:$0xf]
        %982 = vrot.lane.b32.xlu0 %v980, 120
        %v983 = vpop.permute.xlu0 %982
        %984 = vrot.lane.b32.xlu0 %v980, 112
        %v985 = vpop.permute.xlu0 %984
        %986 = vrot.lane.b32.xlu0 %v980, 104
        %v987 = vpop.permute.xlu0 %986
        %v990 = vpack.i.b16 %v983, %v980
        %v991 = vshrl.u32 %v980, 16
        %v992 = vshrl.u32 %v983, 16
        %v993 = vpack.i.b16 %v992, %v991
        %v996 = vpack.i.b16 %v987, %v985
        %v997 = vshrl.u32 %v985, 16
        %v998 = vshrl.u32 %v987, 16
        %v999 = vpack.i.b16 %v998, %v997
        %v1002 = vunpack.c.l.s4 1983009808
        %v1003 = vunpack.c.0.s8 %v1002
        %v1004 = vlaneseq
        %v1005 = vshrl.u32 %v1004, 7
        %v1006 = vsub.s32 %v1003, %v1005
        %v1007 = vrot.slane %v990, %v1006
        %v1010 = vunpack.c.l.s4 1983009808
        %v1011 = vunpack.c.0.s8 %v1010
        %v1012 = vlaneseq
        %v1013 = vshrl.u32 %v1012, 7
        %v1014 = vsub.s32 %v1011, %v1013
        %v1015 = vrot.slane %v996, %v1014
        %v1016 = vcombine.low %v1007, %v1015
        %v1017 = vcombine.high %v1007, %v1015
        %v1019 = vunpack.c.l.s4 1934713408
        %v1020 = vunpack.c.0.s8 %v1019
        %v1021 = vlaneseq
        %v1022 = vshrl.u32 %v1021, 7
        %v1023 = vsub.s32 %v1020, %v1022
        %v1024 = vrot.slane %v1016, %v1023
        %v1026 = vunpack.c.l.s4 1934713408
        %v1027 = vunpack.c.0.s8 %v1026
        %v1028 = vlaneseq
        %v1029 = vshrl.u32 %v1028, 7
        %v1030 = vsub.s32 %v1027, %v1029
        %v1031 = vrot.slane %v1017, %v1030
        %v1032 = vcombine.high %v1024, 0
        %v1033 = vcombine.high %v1031, 0
        %v1036 = vunpack.c.l.s4 1983009808
        %v1037 = vunpack.c.0.s8 %v1036
        %v1038 = vlaneseq
        %v1039 = vshrl.u32 %v1038, 7
        %v1040 = vsub.s32 %v1037, %v1039
        %v1041 = vrot.slane %v993, %v1040
        %v1044 = vunpack.c.l.s4 1983009808
        %v1045 = vunpack.c.0.s8 %v1044
        %v1046 = vlaneseq
        %v1047 = vshrl.u32 %v1046, 7
        %v1048 = vsub.s32 %v1045, %v1047
        %v1049 = vrot.slane %v999, %v1048
        %v1050 = vcombine.low %v1041, %v1049
        %v1051 = vcombine.high %v1041, %v1049
        %v1053 = vunpack.c.l.s4 1934713408
        %v1054 = vunpack.c.0.s8 %v1053
        %v1055 = vlaneseq
        %v1056 = vshrl.u32 %v1055, 7
        %v1057 = vsub.s32 %v1054, %v1056
        %v1058 = vrot.slane %v1050, %v1057
        %v1060 = vunpack.c.l.s4 1934713408
        %v1061 = vunpack.c.0.s8 %v1060
        %v1062 = vlaneseq
        %v1063 = vshrl.u32 %v1062, 7
        %v1064 = vsub.s32 %v1061, %v1063
        %v1065 = vrot.slane %v1051, %v1064
        %v1066 = vcombine.high %v1058, 0
        %v1067 = vcombine.high %v1065, 0
        %v1068 = vcombine.low %v1024, %v1031
        %v1070 = vunpack.c.l.s4 1983009808
        %v1071 = vunpack.c.0.s8 %v1070
        %v1072 = vlaneseq
        %v1073 = vshrl.u32 %v1072, 7
        %v1074 = vsub.s32 %v1071, %v1073
        %v1075 = vrot.slane %v1068, %v1074
        %v1076 = vcombine.low %v1032, %v1033
        %v1078 = vunpack.c.l.s4 1983009808
        %v1079 = vunpack.c.0.s8 %v1078
        %v1080 = vlaneseq
        %v1081 = vshrl.u32 %v1080, 7
        %v1082 = vsub.s32 %v1079, %v1081
        %v1083 = vrot.slane %v1076, %v1082
        %v1084 = vcombine.low %v1075, %v1083
        %v1086 = vunpack.c.l.s4 1934713408
        %v1087 = vunpack.c.0.s8 %v1086
        %v1088 = vlaneseq
        %v1089 = vshrl.u32 %v1088, 7
        %v1090 = vsub.s32 %v1087, %v1089
        %v1091 = vrot.slane %v1084, %v1090
        %v1092 = vcombine.high %v1091, 0
        %v1093 = vcombine.low %v1058, %v1065
        %v1095 = vunpack.c.l.s4 1983009808
        %v1096 = vunpack.c.0.s8 %v1095
        %v1097 = vlaneseq
        %v1098 = vshrl.u32 %v1097, 7
        %v1099 = vsub.s32 %v1096, %v1098
        %v1100 = vrot.slane %v1093, %v1099
        %v1101 = vcombine.low %v1066, %v1067
        %v1103 = vunpack.c.l.s4 1983009808
        %v1104 = vunpack.c.0.s8 %v1103
        %v1105 = vlaneseq
        %v1106 = vshrl.u32 %v1105, 7
        %v1107 = vsub.s32 %v1104, %v1106
        %v1108 = vrot.slane %v1101, %v1107
        %v1109 = vcombine.low %v1100, %v1108
        %v1111 = vunpack.c.l.s4 1934713408
        %v1112 = vunpack.c.0.s8 %v1111
        %v1113 = vlaneseq
        %v1114 = vshrl.u32 %v1113, 7
        %v1115 = vsub.s32 %v1112, %v1114
        %v1116 = vrot.slane %v1109, %v1115
        %v1117 = vcombine.high %v1116, 0
        %v1120 = vpack.i.b16 %v1116, %v1091
        %v1121 = vshrl.u32 %v1091, 16
        %v1122 = vshrl.u32 %v1116, 16
        %v1123 = vpack.i.b16 %v1122, %v1121
        %v1126 = vpack.i.b16 %v1117, %v1092
        %v1127 = vshrl.u32 %v1092, 16
        %v1128 = vshrl.u32 %v1117, 16
        %v1129 = vpack.i.b16 %v1128, %v1127
        %v1130 = vld [vmem:[#allocation3] sm:$0xf]
        %1132 = vrot.lane.b32.xlu0 %v1130, 120
        %v1133 = vpop.permute.xlu0 %1132
        %1134 = vrot.lane.b32.xlu0 %v1130, 112
        %v1135 = vpop.permute.xlu0 %1134
        %1136 = vrot.lane.b32.xlu0 %v1130, 104
        %v1137 = vpop.permute.xlu0 %1136
        %v1140 = vpack.i.b16 %v1133, %v1130
        %v1141 = vshrl.u32 %v1130, 16
        %v1142 = vshrl.u32 %v1133, 16
        %v1143 = vpack.i.b16 %v1142, %v1141
        %v1146 = vpack.i.b16 %v1137, %v1135
        %v1147 = vshrl.u32 %v1135, 16
        %v1148 = vshrl.u32 %v1137, 16
        %v1149 = vpack.i.b16 %v1148, %v1147
        %v1152 = vunpack.c.l.s4 1983009808
        %v1153 = vunpack.c.0.s8 %v1152
        %v1154 = vlaneseq
        %v1155 = vshrl.u32 %v1154, 7
        %v1156 = vsub.s32 %v1153, %v1155
        %v1157 = vrot.slane %v1140, %v1156
        %v1160 = vunpack.c.l.s4 1983009808
        %v1161 = vunpack.c.0.s8 %v1160
        %v1162 = vlaneseq
        %v1163 = vshrl.u32 %v1162, 7
        %v1164 = vsub.s32 %v1161, %v1163
        %v1165 = vrot.slane %v1146, %v1164
        %v1166 = vcombine.low %v1157, %v1165
        %v1167 = vcombine.high %v1157, %v1165
        %v1169 = vunpack.c.l.s4 1934713408
        %v1170 = vunpack.c.0.s8 %v1169
        %v1171 = vlaneseq
        %v1172 = vshrl.u32 %v1171, 7
        %v1173 = vsub.s32 %v1170, %v1172
        %v1174 = vrot.slane %v1166, %v1173
        %v1176 = vunpack.c.l.s4 1934713408
        %v1177 = vunpack.c.0.s8 %v1176
        %v1178 = vlaneseq
        %v1179 = vshrl.u32 %v1178, 7
        %v1180 = vsub.s32 %v1177, %v1179
        %v1181 = vrot.slane %v1167, %v1180
        %v1182 = vcombine.high %v1174, 0
        %v1183 = vcombine.high %v1181, 0
        %v1186 = vunpack.c.l.s4 1983009808
        %v1187 = vunpack.c.0.s8 %v1186
        %v1188 = vlaneseq
        %v1189 = vshrl.u32 %v1188, 7
        %v1190 = vsub.s32 %v1187, %v1189
        %v1191 = vrot.slane %v1143, %v1190
        %v1194 = vunpack.c.l.s4 1983009808
        %v1195 = vunpack.c.0.s8 %v1194
        %v1196 = vlaneseq
        %v1197 = vshrl.u32 %v1196, 7
        %v1198 = vsub.s32 %v1195, %v1197
        %v1199 = vrot.slane %v1149, %v1198
        %v1200 = vcombine.low %v1191, %v1199
        %v1201 = vcombine.high %v1191, %v1199
        %v1203 = vunpack.c.l.s4 1934713408
        %v1204 = vunpack.c.0.s8 %v1203
        %v1205 = vlaneseq
        %v1206 = vshrl.u32 %v1205, 7
        %v1207 = vsub.s32 %v1204, %v1206
        %v1208 = vrot.slane %v1200, %v1207
        %v1210 = vunpack.c.l.s4 1934713408
        %v1211 = vunpack.c.0.s8 %v1210
        %v1212 = vlaneseq
        %v1213 = vshrl.u32 %v1212, 7
        %v1214 = vsub.s32 %v1211, %v1213
        %v1215 = vrot.slane %v1201, %v1214
        %v1216 = vcombine.high %v1208, 0
        %v1217 = vcombine.high %v1215, 0
        %v1218 = vcombine.low %v1174, %v1181
        %v1220 = vunpack.c.l.s4 1983009808
        %v1221 = vunpack.c.0.s8 %v1220
        %v1222 = vlaneseq
        %v1223 = vshrl.u32 %v1222, 7
        %v1224 = vsub.s32 %v1221, %v1223
        %v1225 = vrot.slane %v1218, %v1224
        %v1226 = vcombine.low %v1182, %v1183
        %v1228 = vunpack.c.l.s4 1983009808
        %v1229 = vunpack.c.0.s8 %v1228
        %v1230 = vlaneseq
        %v1231 = vshrl.u32 %v1230, 7
        %v1232 = vsub.s32 %v1229, %v1231
        %v1233 = vrot.slane %v1226, %v1232
        %v1234 = vcombine.low %v1225, %v1233
        %v1236 = vunpack.c.l.s4 1934713408
        %v1237 = vunpack.c.0.s8 %v1236
        %v1238 = vlaneseq
        %v1239 = vshrl.u32 %v1238, 7
        %v1240 = vsub.s32 %v1237, %v1239
        %v1241 = vrot.slane %v1234, %v1240
        %v1242 = vcombine.high %v1241, 0
        %v1243 = vcombine.low %v1208, %v1215
        %v1245 = vunpack.c.l.s4 1983009808
        %v1246 = vunpack.c.0.s8 %v1245
        %v1247 = vlaneseq
        %v1248 = vshrl.u32 %v1247, 7
        %v1249 = vsub.s32 %v1246, %v1248
        %v1250 = vrot.slane %v1243, %v1249
        %v1251 = vcombine.low %v1216, %v1217
        %v1253 = vunpack.c.l.s4 1983009808
        %v1254 = vunpack.c.0.s8 %v1253
        %v1255 = vlaneseq
        %v1256 = vshrl.u32 %v1255, 7
        %v1257 = vsub.s32 %v1254, %v1256
        %v1258 = vrot.slane %v1251, %v1257
        %v1259 = vcombine.low %v1250, %v1258
        %v1261 = vunpack.c.l.s4 1934713408
        %v1262 = vunpack.c.0.s8 %v1261
        %v1263 = vlaneseq
        %v1264 = vshrl.u32 %v1263, 7
        %v1265 = vsub.s32 %v1262, %v1264
        %v1266 = vrot.slane %v1259, %v1265
        %v1267 = vcombine.high %v1266, 0
        %v1270 = vpack.i.b16 %v1266, %v1241
        %v1271 = vshrl.u32 %v1241, 16
        %v1272 = vshrl.u32 %v1266, 16
        %v1273 = vpack.i.b16 %v1272, %v1271
        %v1276 = vpack.i.b16 %v1267, %v1242
        %v1277 = vshrl.u32 %v1242, 16
        %v1278 = vshrl.u32 %v1267, 16
        %v1279 = vpack.i.b16 %v1278, %v1277
        %v1280 = vld [vmem:[%s526] sm:$0xf]
        %v1281 = vunpack.c.l.bf16 %v1280
        %vm1282 = vcmask 64512
        %v1284 = vsel %vm1282, %v970, 0
        %v1287 = vsel %vm1282, %v1120, 0
        %1289 = vmatprep.subr.bf16.mxu0 0
        %1290 = vmatpush1.bf16.xpose.msra.mxu0 %v1287
        %1291 = vmatprep.subr.bf16.mxu0 0
        %1292 = vmatpush1.bf16.xpose.msra.mxu0 0
        %1293 = vmatprep.subr.bf16.mxu0 0
        %1294 = vmatpush1.bf16.xpose.msra.mxu0 0
        %1295 = vmatprep.subr.bf16.mxu0 0
        %1296 = vmatpush1.bf16.xpose.msra.mxu0 0
        %1297 = vmatprep.subr.bf16.mxu0 0
        %1298 = vmatpush1.bf16.xpose.msra.mxu0 0
        %1299 = vmatprep.subr.bf16.mxu0 0
        %1300 = vmatpush1.bf16.xpose.msra.mxu0 0
        %1301 = vmatprep.subr.bf16.mxu0 0
        %1302 = vmatpush1.bf16.xpose.msra.mxu0 0
        %1303 = vmatprep.subr.bf16.mxu0 0
        %1304 = vmatpush1.bf16.xpose.msra.mxu0 0
        %1305 = vmatprep.subr.bf16.mxu0 0
        %1306 = vmatpush1.bf16.xpose.msra.mxu0 0
        %1307 = vmatprep.subr.bf16.mxu0 0
        %1308 = vmatpush1.bf16.xpose.msra.mxu0 0
        %1309 = vmatprep.subr.bf16.mxu0 0
        %1310 = vmatpush1.bf16.xpose.msra.mxu0 0
        %1311 = vmatprep.subr.bf16.mxu0 0
        %1312 = vmatpush1.bf16.xpose.msra.mxu0 0
        %1313 = vmatprep.subr.bf16.mxu0 0
        %1314 = vmatpush1.bf16.xpose.msra.mxu0 0
        %1315 = vmatprep.subr.bf16.mxu0 0
        %1316 = vmatpush1.bf16.xpose.msra.mxu0 0
        %1317 = vmatprep.subr.bf16.mxu0 0
        %1318 = vmatpush1.bf16.xpose.msra.mxu0 0
        %1319 = vmatprep.subr.bf16.mxu0 0
        %1320 = vmatpush1.bf16.xpose.msra.mxu0 0
        %1321 = vmatprep.mubr.bf16.mxu0 0
        %1322 = vmatmul.mubr.bf16.gmra.mrb[0].mxu0 %v1284
        %v1323 = vpop.f32.mrb[0].mxu0
        %v1324 = vadd.f32 %v1281, %v1323
        %v1325 = vpop.f32.mrb[0].mxu0
        %v1326 = vpop.f32.mrb[0].mxu0
        %v1327 = vpop.f32.mrb[0].mxu0
        %1328 = vdwg.mxu0
        %v1330 = vsel %vm1282, %v973, 0
        %v1333 = vsel %vm1282, %v1123, 0
        %1335 = vmatprep.subr.bf16.mxu0 0
        %1336 = vmatpush1.bf16.xpose.msra.mxu0 %v1333
        %1337 = vmatprep.subr.bf16.mxu0 0
        %1338 = vmatpush1.bf16.xpose.msra.mxu0 0
        %1339 = vmatprep.subr.bf16.mxu0 0
        %1340 = vmatpush1.bf16.xpose.msra.mxu0 0
        %1341 = vmatprep.subr.bf16.mxu0 0
        %1342 = vmatpush1.bf16.xpose.msra.mxu0 0
        %1343 = vmatprep.subr.bf16.mxu0 0
        %1344 = vmatpush1.bf16.xpose.msra.mxu0 0
        %1345 = vmatprep.subr.bf16.mxu0 0
        %1346 = vmatpush1.bf16.xpose.msra.mxu0 0
        %1347 = vmatprep.subr.bf16.mxu0 0
        %1348 = vmatpush1.bf16.xpose.msra.mxu0 0
        %1349 = vmatprep.subr.bf16.mxu0 0
        %1350 = vmatpush1.bf16.xpose.msra.mxu0 0
        %1351 = vmatprep.subr.bf16.mxu0 0
        %1352 = vmatpush1.bf16.xpose.msra.mxu0 0
        %1353 = vmatprep.subr.bf16.mxu0 0
        %1354 = vmatpush1.bf16.xpose.msra.mxu0 0
        %1355 = vmatprep.subr.bf16.mxu0 0
        %1356 = vmatpush1.bf16.xpose.msra.mxu0 0
        %1357 = vmatprep.subr.bf16.mxu0 0
        %1358 = vmatpush1.bf16.xpose.msra.mxu0 0
        %1359 = vmatprep.subr.bf16.mxu0 0
        %1360 = vmatpush1.bf16.xpose.msra.mxu0 0
        %1361 = vmatprep.subr.bf16.mxu0 0
        %1362 = vmatpush1.bf16.xpose.msra.mxu0 0
        %1363 = vmatprep.subr.bf16.mxu0 0
        %1364 = vmatpush1.bf16.xpose.msra.mxu0 0
        %1365 = vmatprep.subr.bf16.mxu0 0
        %1366 = vmatpush1.bf16.xpose.msra.mxu0 0
        %1367 = vmatprep.mubr.bf16.mxu0 0
        %1368 = vmatmul.mubr.bf16.gmra.mrb[0].mxu0 %v1330
        %v1369 = vpop.f32.mrb[0].mxu0
        %v1370 = vadd.f32 %v1281, %v1369
        %v1371 = vpop.f32.mrb[0].mxu0
        %v1372 = vpop.f32.mrb[0].mxu0
        %v1373 = vpop.f32.mrb[0].mxu0
        %1374 = vdwg.mxu0
        %v1376 = vsel %vm1282, %v976, 0
        %v1379 = vsel %vm1282, %v1126, 0
        %1381 = vmatprep.subr.bf16.mxu0 0
        %1382 = vmatpush1.bf16.xpose.msra.mxu0 %v1379
        %1383 = vmatprep.subr.bf16.mxu0 0
        %1384 = vmatpush1.bf16.xpose.msra.mxu0 0
        %1385 = vmatprep.subr.bf16.mxu0 0
        %1386 = vmatpush1.bf16.xpose.msra.mxu0 0
        %1387 = vmatprep.subr.bf16.mxu0 0
        %1388 = vmatpush1.bf16.xpose.msra.mxu0 0
        %1389 = vmatprep.subr.bf16.mxu0 0
        %1390 = vmatpush1.bf16.xpose.msra.mxu0 0
        %1391 = vmatprep.subr.bf16.mxu0 0
        %1392 = vmatpush1.bf16.xpose.msra.mxu0 0
        %1393 = vmatprep.subr.bf16.mxu0 0
        %1394 = vmatpush1.bf16.xpose.msra.mxu0 0
        %1395 = vmatprep.subr.bf16.mxu0 0
        %1396 = vmatpush1.bf16.xpose.msra.mxu0 0
        %1397 = vmatprep.subr.bf16.mxu0 0
        %1398 = vmatpush1.bf16.xpose.msra.mxu0 0
        %1399 = vmatprep.subr.bf16.mxu0 0
        %1400 = vmatpush1.bf16.xpose.msra.mxu0 0
        %1401 = vmatprep.subr.bf16.mxu0 0
        %1402 = vmatpush1.bf16.xpose.msra.mxu0 0
        %1403 = vmatprep.subr.bf16.mxu0 0
        %1404 = vmatpush1.bf16.xpose.msra.mxu0 0
        %1405 = vmatprep.subr.bf16.mxu0 0
        %1406 = vmatpush1.bf16.xpose.msra.mxu0 0
        %1407 = vmatprep.subr.bf16.mxu0 0
        %1408 = vmatpush1.bf16.xpose.msra.mxu0 0
        %1409 = vmatprep.subr.bf16.mxu0 0
        %1410 = vmatpush1.bf16.xpose.msra.mxu0 0
        %1411 = vmatprep.subr.bf16.mxu0 0
        %1412 = vmatpush1.bf16.xpose.msra.mxu0 0
        %1413 = vmatprep.mubr.bf16.mxu0 0
        %1414 = vmatmul.mubr.bf16.gmra.mrb[0].mxu0 %v1376
        %v1415 = vpop.f32.mrb[0].mxu0
        %v1416 = vadd.f32 %v1281, %v1415
        %v1417 = vpop.f32.mrb[0].mxu0
        %v1418 = vpop.f32.mrb[0].mxu0
        %v1419 = vpop.f32.mrb[0].mxu0
        %1420 = vdwg.mxu0
        %v1422 = vsel %vm1282, %v979, 0
        %v1425 = vsel %vm1282, %v1129, 0
        %1427 = vmatprep.subr.bf16.mxu0 0
        %1428 = vmatpush1.bf16.xpose.msra.mxu0 %v1425
        %1429 = vmatprep.subr.bf16.mxu0 0
        %1430 = vmatpush1.bf16.xpose.msra.mxu0 0
        %1431 = vmatprep.subr.bf16.mxu0 0
        %1432 = vmatpush1.bf16.xpose.msra.mxu0 0
        %1433 = vmatprep.subr.bf16.mxu0 0
        %1434 = vmatpush1.bf16.xpose.msra.mxu0 0
        %1435 = vmatprep.subr.bf16.mxu0 0
        %1436 = vmatpush1.bf16.xpose.msra.mxu0 0
        %1437 = vmatprep.subr.bf16.mxu0 0
        %1438 = vmatpush1.bf16.xpose.msra.mxu0 0
        %1439 = vmatprep.subr.bf16.mxu0 0
        %1440 = vmatpush1.bf16.xpose.msra.mxu0 0
        %1441 = vmatprep.subr.bf16.mxu0 0
        %1442 = vmatpush1.bf16.xpose.msra.mxu0 0
        %1443 = vmatprep.subr.bf16.mxu0 0
        %1444 = vmatpush1.bf16.xpose.msra.mxu0 0
        %1445 = vmatprep.subr.bf16.mxu0 0
        %1446 = vmatpush1.bf16.xpose.msra.mxu0 0
        %1447 = vmatprep.subr.bf16.mxu0 0
        %1448 = vmatpush1.bf16.xpose.msra.mxu0 0
        %1449 = vmatprep.subr.bf16.mxu0 0
        %1450 = vmatpush1.bf16.xpose.msra.mxu0 0
        %1451 = vmatprep.subr.bf16.mxu0 0
        %1452 = vmatpush1.bf16.xpose.msra.mxu0 0
        %1453 = vmatprep.subr.bf16.mxu0 0
        %1454 = vmatpush1.bf16.xpose.msra.mxu0 0
        %1455 = vmatprep.subr.bf16.mxu0 0
        %1456 = vmatpush1.bf16.xpose.msra.mxu0 0
        %1457 = vmatprep.subr.bf16.mxu0 0
        %1458 = vmatpush1.bf16.xpose.msra.mxu0 0
        %1459 = vmatprep.mubr.bf16.mxu0 0
        %1460 = vmatmul.mubr.bf16.gmra.mrb[0].mxu0 %v1422
        %v1461 = vpop.f32.mrb[0].mxu0
        %v1462 = vadd.f32 %v1281, %v1461
        %v1463 = vpop.f32.mrb[0].mxu0
        %v1464 = vpop.f32.mrb[0].mxu0
        %v1465 = vpop.f32.mrb[0].mxu0
        %1466 = vdwg.mxu0
        %v1467 = vsel %vm1282, %v1324, -inf
        %1468 = vmax.xlane.f32.xlu0 %v1467
        %v1469 = vpop.xlane.xlu0 %1468
        %v1470 = vsel %vm1282, %v1370, -inf
        %1471 = vmax.xlane.f32.xlu0 %v1470
        %v1472 = vpop.xlane.xlu0 %1471
        %v1473 = vsel %vm1282, %v1416, -inf
        %1474 = vmax.xlane.f32.xlu0 %v1473
        %v1475 = vpop.xlane.xlu0 %1474
        %v1476 = vsel %vm1282, %v1462, -inf
        %1477 = vmax.xlane.f32.xlu0 %v1476
        %v1478 = vpop.xlane.xlu0 %1477
        %v1479 = vsub.f32 %v1324, %v1469
        %v1480 = vsub.f32 %v1370, %v1472
        %v1481 = vsub.f32 %v1416, %v1475
        %v1482 = vsub.f32 %v1462, %v1478
        %v1483 = vmul.f32 %v1479, 1.442695
        %v1484 = vpow.pop %v1483
        %v1485 = vmul.f32 %v1480, 1.442695
        %v1486 = vpow.pop %v1485
        %v1487 = vmul.f32 %v1481, 1.442695
        %v1488 = vpow.pop %v1487
        %v1489 = vmul.f32 %v1482, 1.442695
        %v1490 = vpow.pop %v1489
        %v1491 = vsel %vm1282, %v1484, 0.0
        %1492 = vadd.xlane.f32.xlu0 %v1491
        %v1493 = vpop.xlane.xlu0 %1492
        %v1494 = vsel %vm1282, %v1486, 0.0
        %1495 = vadd.xlane.f32.xlu0 %v1494
        %v1496 = vpop.xlane.xlu0 %1495
        %v1497 = vsel %vm1282, %v1488, 0.0
        %1498 = vadd.xlane.f32.xlu0 %v1497
        %v1499 = vpop.xlane.xlu0 %1498
        %v1500 = vsel %vm1282, %v1490, 0.0
        %1501 = vadd.xlane.f32.xlu0 %v1500
        %v1502 = vpop.xlane.xlu0 %1501
        %v1503 = vrcp.pop %v1493
        %v1504 = vrcp.pop %v1496
        %v1505 = vrcp.pop %v1499
        %v1506 = vrcp.pop %v1502
        %v1507 = vmul.f32 %v1484, %v1503
        %v1508 = vmul.f32 %v1486, %v1504
        %v1509 = vmul.f32 %v1488, %v1505
        %v1510 = vmul.f32 %v1490, %v1506
        %v1511 = vpack.c.bf16 %v1507, %v1507
        %v1512 = vpack.c.bf16 %v1508, %v1508
        %v1513 = vpack.c.bf16 %v1509, %v1509
        %v1514 = vpack.c.bf16 %v1510, %v1510
        %v1516 = vsel %vm1282, %v1511, 0
        %vm1518 = vcmask 1043456
        %v1520 = vsel %vm1518, %v1270, 0
        %1522 = vmatprep.subr.bf16.mxu0 0
        %1523 = vmatpush1.bf16.msra.mxu0 %v1520
        %1524 = vmatprep.subr.bf16.mxu0 0
        %1525 = vmatpush1.bf16.msra.mxu0 0
        %1526 = vmatprep.subr.bf16.mxu0 0
        %1527 = vmatpush1.bf16.msra.mxu0 0
        %1528 = vmatprep.subr.bf16.mxu0 0
        %1529 = vmatpush1.bf16.msra.mxu0 0
        %1530 = vmatprep.subr.bf16.mxu0 0
        %1531 = vmatpush1.bf16.msra.mxu0 0
        %1532 = vmatprep.subr.bf16.mxu0 0
        %1533 = vmatpush1.bf16.msra.mxu0 0
        %1534 = vmatprep.subr.bf16.mxu0 0
        %1535 = vmatpush1.bf16.msra.mxu0 0
        %1536 = vmatprep.subr.bf16.mxu0 0
        %1537 = vmatpush1.bf16.msra.mxu0 0
        %1538 = vmatprep.subr.bf16.mxu0 0
        %1539 = vmatpush1.bf16.msra.mxu0 0
        %1540 = vmatprep.subr.bf16.mxu0 0
        %1541 = vmatpush1.bf16.msra.mxu0 0
        %1542 = vmatprep.subr.bf16.mxu0 0
        %1543 = vmatpush1.bf16.msra.mxu0 0
        %1544 = vmatprep.subr.bf16.mxu0 0
        %1545 = vmatpush1.bf16.msra.mxu0 0
        %1546 = vmatprep.subr.bf16.mxu0 0
        %1547 = vmatpush1.bf16.msra.mxu0 0
        %1548 = vmatprep.subr.bf16.mxu0 0
        %1549 = vmatpush1.bf16.msra.mxu0 0
        %1550 = vmatprep.subr.bf16.mxu0 0
        %1551 = vmatpush1.bf16.msra.mxu0 0
        %1552 = vmatprep.subr.bf16.mxu0 0
        %1553 = vmatpush1.bf16.msra.mxu0 0
        %1554 = vmatprep.mubr.bf16.mxu0 0
        %1555 = vmatmul.mubr.bf16.gmra.mrb[0].mxu0 %v1516
        %v1556 = vpop.f32.mrb[0].mxu0
        %v1557 = vadd.f32 0.0, %v1556
        %v1558 = vpop.f32.mrb[0].mxu0
        %v1559 = vpop.f32.mrb[0].mxu0
        %v1560 = vpop.f32.mrb[0].mxu0
        %1561 = vdwg.mxu0
        %v1563 = vsel %vm1282, %v1512, 0
        %v1566 = vsel %vm1518, %v1273, 0
        %1568 = vmatprep.subr.bf16.mxu0 0
        %1569 = vmatpush1.bf16.msra.mxu0 %v1566
        %1570 = vmatprep.subr.bf16.mxu0 0
        %1571 = vmatpush1.bf16.msra.mxu0 0
        %1572 = vmatprep.subr.bf16.mxu0 0
        %1573 = vmatpush1.bf16.msra.mxu0 0
        %1574 = vmatprep.subr.bf16.mxu0 0
        %1575 = vmatpush1.bf16.msra.mxu0 0
        %1576 = vmatprep.subr.bf16.mxu0 0
        %1577 = vmatpush1.bf16.msra.mxu0 0
        %1578 = vmatprep.subr.bf16.mxu0 0
        %1579 = vmatpush1.bf16.msra.mxu0 0
        %1580 = vmatprep.subr.bf16.mxu0 0
        %1581 = vmatpush1.bf16.msra.mxu0 0
        %1582 = vmatprep.subr.bf16.mxu0 0
        %1583 = vmatpush1.bf16.msra.mxu0 0
        %1584 = vmatprep.subr.bf16.mxu0 0
        %1585 = vmatpush1.bf16.msra.mxu0 0
        %1586 = vmatprep.subr.bf16.mxu0 0
        %1587 = vmatpush1.bf16.msra.mxu0 0
        %1588 = vmatprep.subr.bf16.mxu0 0
        %1589 = vmatpush1.bf16.msra.mxu0 0
        %1590 = vmatprep.subr.bf16.mxu0 0
        %1591 = vmatpush1.bf16.msra.mxu0 0
        %1592 = vmatprep.subr.bf16.mxu0 0
        %1593 = vmatpush1.bf16.msra.mxu0 0
        %1594 = vmatprep.subr.bf16.mxu0 0
        %1595 = vmatpush1.bf16.msra.mxu0 0
        %1596 = vmatprep.subr.bf16.mxu0 0
        %1597 = vmatpush1.bf16.msra.mxu0 0
        %1598 = vmatprep.subr.bf16.mxu0 0
        %1599 = vmatpush1.bf16.msra.mxu0 0
        %1600 = vmatprep.mubr.bf16.mxu0 0
        %1601 = vmatmul.mubr.bf16.gmra.mrb[0].mxu0 %v1563
        %v1602 = vpop.f32.mrb[0].mxu0
        %v1603 = vadd.f32 0.0, %v1602
        %v1604 = vpop.f32.mrb[0].mxu0
        %v1605 = vpop.f32.mrb[0].mxu0
        %v1606 = vpop.f32.mrb[0].mxu0
        %1607 = vdwg.mxu0
        %v1609 = vsel %vm1282, %v1513, 0
        %v1612 = vsel %vm1518, %v1276, 0
        %1614 = vmatprep.subr.bf16.mxu0 0
        %1615 = vmatpush1.bf16.msra.mxu0 %v1612
        %1616 = vmatprep.subr.bf16.mxu0 0
        %1617 = vmatpush1.bf16.msra.mxu0 0
        %1618 = vmatprep.subr.bf16.mxu0 0
        %1619 = vmatpush1.bf16.msra.mxu0 0
        %1620 = vmatprep.subr.bf16.mxu0 0
        %1621 = vmatpush1.bf16.msra.mxu0 0
        %1622 = vmatprep.subr.bf16.mxu0 0
        %1623 = vmatpush1.bf16.msra.mxu0 0
        %1624 = vmatprep.subr.bf16.mxu0 0
        %1625 = vmatpush1.bf16.msra.mxu0 0
        %1626 = vmatprep.subr.bf16.mxu0 0
        %1627 = vmatpush1.bf16.msra.mxu0 0
        %1628 = vmatprep.subr.bf16.mxu0 0
        %1629 = vmatpush1.bf16.msra.mxu0 0
        %1630 = vmatprep.subr.bf16.mxu0 0
        %1631 = vmatpush1.bf16.msra.mxu0 0
        %1632 = vmatprep.subr.bf16.mxu0 0
        %1633 = vmatpush1.bf16.msra.mxu0 0
        %1634 = vmatprep.subr.bf16.mxu0 0
        %1635 = vmatpush1.bf16.msra.mxu0 0
        %1636 = vmatprep.subr.bf16.mxu0 0
        %1637 = vmatpush1.bf16.msra.mxu0 0
        %1638 = vmatprep.subr.bf16.mxu0 0
        %1639 = vmatpush1.bf16.msra.mxu0 0
        %1640 = vmatprep.subr.bf16.mxu0 0
        %1641 = vmatpush1.bf16.msra.mxu0 0
        %1642 = vmatprep.subr.bf16.mxu0 0
        %1643 = vmatpush1.bf16.msra.mxu0 0
        %1644 = vmatprep.subr.bf16.mxu0 0
        %1645 = vmatpush1.bf16.msra.mxu0 0
        %1646 = vmatprep.mubr.bf16.mxu0 0
        %1647 = vmatmul.mubr.bf16.gmra.mrb[0].mxu0 %v1609
        %v1648 = vpop.f32.mrb[0].mxu0
        %v1649 = vadd.f32 0.0, %v1648
        %v1650 = vpop.f32.mrb[0].mxu0
        %v1651 = vpop.f32.mrb[0].mxu0
        %v1652 = vpop.f32.mrb[0].mxu0
        %1653 = vdwg.mxu0
        %v1655 = vsel %vm1282, %v1514, 0
        %v1658 = vsel %vm1518, %v1279, 0
        %1660 = vmatprep.subr.bf16.mxu0 0
        %1661 = vmatpush1.bf16.msra.mxu0 %v1658
        %1662 = vmatprep.subr.bf16.mxu0 0
        %1663 = vmatpush1.bf16.msra.mxu0 0
        %1664 = vmatprep.subr.bf16.mxu0 0
        %1665 = vmatpush1.bf16.msra.mxu0 0
        %1666 = vmatprep.subr.bf16.mxu0 0
        %1667 = vmatpush1.bf16.msra.mxu0 0
        %1668 = vmatprep.subr.bf16.mxu0 0
        %1669 = vmatpush1.bf16.msra.mxu0 0
        %1670 = vmatprep.subr.bf16.mxu0 0
        %1671 = vmatpush1.bf16.msra.mxu0 0
        %1672 = vmatprep.subr.bf16.mxu0 0
        %1673 = vmatpush1.bf16.msra.mxu0 0
        %1674 = vmatprep.subr.bf16.mxu0 0
        %1675 = vmatpush1.bf16.msra.mxu0 0
        %1676 = vmatprep.subr.bf16.mxu0 0
        %1677 = vmatpush1.bf16.msra.mxu0 0
        %1678 = vmatprep.subr.bf16.mxu0 0
        %1679 = vmatpush1.bf16.msra.mxu0 0
        %1680 = vmatprep.subr.bf16.mxu0 0
        %1681 = vmatpush1.bf16.msra.mxu0 0
        %1682 = vmatprep.subr.bf16.mxu0 0
        %1683 = vmatpush1.bf16.msra.mxu0 0
        %1684 = vmatprep.subr.bf16.mxu0 0
        %1685 = vmatpush1.bf16.msra.mxu0 0
        %1686 = vmatprep.subr.bf16.mxu0 0
        %1687 = vmatpush1.bf16.msra.mxu0 0
        %1688 = vmatprep.subr.bf16.mxu0 0
        %1689 = vmatpush1.bf16.msra.mxu0 0
        %1690 = vmatprep.subr.bf16.mxu0 0
        %1691 = vmatpush1.bf16.msra.mxu0 0
        %1692 = vmatprep.mubr.bf16.mxu0 0
        %1693 = vmatmul.mubr.bf16.gmra.mrb[0].mxu0 %v1655
        %v1694 = vpop.f32.mrb[0].mxu0
        %v1695 = vadd.f32 0.0, %v1694
        %v1696 = vpop.f32.mrb[0].mxu0
        %v1697 = vpop.f32.mrb[0].mxu0
        %v1698 = vpop.f32.mrb[0].mxu0
        %1699 = vdwg.mxu0
        %v1700 = vcombine.low %v1557, %v1649
        %v1701 = vcombine.high %v1557, %v1649
        %v1703 = vunpack.c.l.s4 1983009808
        %v1704 = vunpack.c.0.s8 %v1703
        %v1705 = vlaneseq
        %v1706 = vshrl.u32 %v1705, 7
        %v1707 = vsub.s32 %v1704, %v1706
        %v1708 = vrot.slane %v1700, %v1707
        %v1710 = vunpack.c.l.s4 1983009808
        %v1711 = vunpack.c.0.s8 %v1710
        %v1712 = vlaneseq
        %v1713 = vshrl.u32 %v1712, 7
        %v1714 = vsub.s32 %v1711, %v1713
        %v1715 = vrot.slane %v1701, %v1714
        %v1716 = vcombine.low %v1603, %v1695
        %v1717 = vcombine.high %v1603, %v1695
        %v1719 = vunpack.c.l.s4 1983009808
        %v1720 = vunpack.c.0.s8 %v1719
        %v1721 = vlaneseq
        %v1722 = vshrl.u32 %v1721, 7
        %v1723 = vsub.s32 %v1720, %v1722
        %v1724 = vrot.slane %v1716, %v1723
        %v1726 = vunpack.c.l.s4 1983009808
        %v1727 = vunpack.c.0.s8 %v1726
        %v1728 = vlaneseq
        %v1729 = vshrl.u32 %v1728, 7
        %v1730 = vsub.s32 %v1727, %v1729
        %v1731 = vrot.slane %v1717, %v1730
        %v1732 = vcombine.low %v1708, %v1724
        %v1733 = vcombine.high %v1708, %v1724
        %v1735 = vunpack.c.l.s4 1934713408
        %v1736 = vunpack.c.0.s8 %v1735
        %v1737 = vlaneseq
        %v1738 = vshrl.u32 %v1737, 7
        %v1739 = vsub.s32 %v1736, %v1738
        %v1740 = vrot.slane %v1732, %v1739
        %v1742 = vunpack.c.l.s4 1934713408
        %v1743 = vunpack.c.0.s8 %v1742
        %v1744 = vlaneseq
        %v1745 = vshrl.u32 %v1744, 7
        %v1746 = vsub.s32 %v1743, %v1745
        %v1747 = vrot.slane %v1733, %v1746
        %v1748 = vcombine.low %v1715, %v1731
        %v1749 = vcombine.high %v1715, %v1731
        %v1751 = vunpack.c.l.s4 1934713408
        %v1752 = vunpack.c.0.s8 %v1751
        %v1753 = vlaneseq
        %v1754 = vshrl.u32 %v1753, 7
        %v1755 = vsub.s32 %v1752, %v1754
        %v1756 = vrot.slane %v1748, %v1755
        %v1758 = vunpack.c.l.s4 1934713408
        %v1759 = vunpack.c.0.s8 %v1758
        %v1760 = vlaneseq
        %v1761 = vshrl.u32 %v1760, 7
        %v1762 = vsub.s32 %v1759, %v1761
        %v1763 = vrot.slane %v1749, %v1762
        %v1764 = vcombine.high %v1740, 0.0
        %v1765 = vcombine.high %v1747, 0.0
        %v1766 = vcombine.high %v1756, 0.0
        %v1767 = vcombine.high %v1763, 0.0
        %v1768 = vcombine.low %v1740, %v1747
        %v1770 = vunpack.c.l.s4 1983009808
        %v1771 = vunpack.c.0.s8 %v1770
        %v1772 = vlaneseq
        %v1773 = vshrl.u32 %v1772, 7
        %v1774 = vsub.s32 %v1771, %v1773
        %v1775 = vrot.slane %v1768, %v1774
        %v1776 = vcombine.low %v1764, %v1765
        %v1778 = vunpack.c.l.s4 1983009808
        %v1779 = vunpack.c.0.s8 %v1778
        %v1780 = vlaneseq
        %v1781 = vshrl.u32 %v1780, 7
        %v1782 = vsub.s32 %v1779, %v1781
        %v1783 = vrot.slane %v1776, %v1782
        %v1784 = vcombine.low %v1756, %v1763
        %v1786 = vunpack.c.l.s4 1983009808
        %v1787 = vunpack.c.0.s8 %v1786
        %v1788 = vlaneseq
        %v1789 = vshrl.u32 %v1788, 7
        %v1790 = vsub.s32 %v1787, %v1789
        %v1791 = vrot.slane %v1784, %v1790
        %v1792 = vcombine.low %v1766, %v1767
        %v1794 = vunpack.c.l.s4 1983009808
        %v1795 = vunpack.c.0.s8 %v1794
        %v1796 = vlaneseq
        %v1797 = vshrl.u32 %v1796, 7
        %v1798 = vsub.s32 %v1795, %v1797
        %v1799 = vrot.slane %v1792, %v1798
        %v1800 = vcombine.low %v1775, %v1783
        %v1801 = vcombine.high %v1775, %v1783
        %v1803 = vunpack.c.l.s4 1934713408
        %v1804 = vunpack.c.0.s8 %v1803
        %v1805 = vlaneseq
        %v1806 = vshrl.u32 %v1805, 7
        %v1807 = vsub.s32 %v1804, %v1806
        %v1808 = vrot.slane %v1800, %v1807
        %v1810 = vunpack.c.l.s4 1934713408
        %v1811 = vunpack.c.0.s8 %v1810
        %v1812 = vlaneseq
        %v1813 = vshrl.u32 %v1812, 7
        %v1814 = vsub.s32 %v1811, %v1813
        %v1815 = vrot.slane %v1801, %v1814
        %v1816 = vcombine.low %v1791, %v1799
        %v1817 = vcombine.high %v1791, %v1799
        %v1819 = vunpack.c.l.s4 1934713408
        %v1820 = vunpack.c.0.s8 %v1819
        %v1821 = vlaneseq
        %v1822 = vshrl.u32 %v1821, 7
        %v1823 = vsub.s32 %v1820, %v1822
        %v1824 = vrot.slane %v1816, %v1823
        %v1826 = vunpack.c.l.s4 1934713408
        %v1827 = vunpack.c.0.s8 %v1826
        %v1828 = vlaneseq
        %v1829 = vshrl.u32 %v1828, 7
        %v1830 = vsub.s32 %v1827, %v1829
        %v1831 = vrot.slane %v1817, %v1830
        %v1832 = vcombine.low %v1808, %v1824
        %v1833 = vcombine.high %v1808, %v1824
        %v1834 = vcombine.low %v1815, %v1831
        %v1835 = vcombine.high %v1815, %v1831
        %1837 = vrot.lane.b32.xlu0 %v1833, 8
        %v1838 = vpop.permute.xlu0 %1837
        %1841 = vrot.lane.b32.xlu0 %v1834, 16
        %v1842 = vpop.permute.xlu0 %1841
        %1845 = vrot.lane.b32.xlu0 %v1835, 24
        %v1846 = vpop.permute.xlu0 %1845
        %v1848 = vsel %vm1282, %v1832, %v1838
        %vm1849 = vcmask 130048
        %v1850 = vsel %vm1849, %v1848, %v1842
        %vm1851 = vcmask 195584
        %v1852 = vsel %vm1851, %v1850, %v1846
        %v1853 = vpack.c.bf16 %v1852, %v1852
        %v1854 = vld [vmem:[#allocation15] sm:$0xf]
        %v1855 = vld [vmem:[#allocation15 + $0x4] sm:$0xf]
        %v1856 = vld [vmem:[#allocation15 + $0x8] sm:$0xf]
        %v1857 = vld [vmem:[#allocation15 + $0xc] sm:$0xf]
        %v1858 = vlaneseq
        %v1859 = vshrl.u32 %v1858, 7
        %v1860 = vsub.s32 3, %v1859
        %v1861 = vrot.slane %v608, %v1860
        %v1866 = vunpack.c.l.b16 %v1854
        %v1867 = vunpack.c.l.b16 %v1855
        %v1868 = vunpack.c.l.b16 %v1856
        %v1869 = vunpack.c.l.b16 %v1857
        %v1870 = vpack.c.b16 %v1867, %v1866
        %v1871 = vpack.c.b16 %v1869, %v1868
        %v1875 = vsel %vm767, %v1853, 0
        %1877 = vmatprep.subr.bf16.mxu0 0
        %1878 = vmatpush1.bf16.msra.mxu0 %v1870
        %1879 = vmatprep.subr.bf16.mxu0 0
        %1880 = vmatpush1.bf16.msra.mxu0 %v1871
        %1881 = vmatprep.subr.bf16.mxu0 0
        %1882 = vmatpush1.bf16.msra.mxu0 0
        %1883 = vmatprep.subr.bf16.mxu0 0
        %1884 = vmatpush1.bf16.msra.mxu0 0
        %1885 = vmatprep.subr.bf16.mxu0 0
        %1886 = vmatpush1.bf16.msra.mxu0 0
        %1887 = vmatprep.subr.bf16.mxu0 0
        %1888 = vmatpush1.bf16.msra.mxu0 0
        %1889 = vmatprep.subr.bf16.mxu0 0
        %1890 = vmatpush1.bf16.msra.mxu0 0
        %1891 = vmatprep.subr.bf16.mxu0 0
        %1892 = vmatpush1.bf16.msra.mxu0 0
        %1893 = vmatprep.subr.bf16.mxu0 0
        %1894 = vmatpush1.bf16.msra.mxu0 0
        %1895 = vmatprep.subr.bf16.mxu0 0
        %1896 = vmatpush1.bf16.msra.mxu0 0
        %1897 = vmatprep.subr.bf16.mxu0 0
        %1898 = vmatpush1.bf16.msra.mxu0 0
        %1899 = vmatprep.subr.bf16.mxu0 0
        %1900 = vmatpush1.bf16.msra.mxu0 0
        %1901 = vmatprep.subr.bf16.mxu0 0
        %1902 = vmatpush1.bf16.msra.mxu0 0
        %1903 = vmatprep.subr.bf16.mxu0 0
        %1904 = vmatpush1.bf16.msra.mxu0 0
        %1905 = vmatprep.subr.bf16.mxu0 0
        %1906 = vmatpush1.bf16.msra.mxu0 0
        %1907 = vmatprep.subr.bf16.mxu0 0
        %1908 = vmatpush1.bf16.msra.mxu0 0
        %1909 = vmatprep.mubr.bf16.mxu0 0
        %1910 = vmatmul.mubr.bf16.gmra.mrb[0].mxu0 %v1875
        %v1911 = vpop.f32.mrb[0].mxu0
        %v1912 = vadd.f32 %v1861, %v1911
        %v1913 = vpop.f32.mrb[0].mxu0
        %v1914 = vpop.f32.mrb[0].mxu0
        %v1915 = vpop.f32.mrb[0].mxu0
        %1916 = vdwg.mxu0
        %v1917 = vadd.f32 %v1912, %v745
        %v1918 = vsel %vm767, %v1917, 0.0
        %1919 = vadd.xlane.f32.xlu0 %v1918
        %v1920 = vpop.xlane.xlu0 %1919
        %v1921 = vrcp.pop 32.0
        %v1922 = vmul.f32 %v1920, %v1921
        %v1923 = vsub.f32 %v1917, %v1922
        %v1924 = vmul.f32 %v1923, %v1923
        %v1925 = vsel %vm767, %v1924, 0.0
        %1926 = vadd.xlane.f32.xlu0 %v1925
        %v1927 = vpop.xlane.xlu0 %1926
        %v1928 = vmul.f32 %v1927, 0.032258064
        %v1929 = vrsqrt.pop %v1928
        %v1930 = vmul.f32 %v1928, %v1929
        %vm1931 = vcmp.eq.f32.partialorder %v1928, inf
        %v1932 = vsel %vm1931, %v1928, %v1930
        %vm1933 = vcmp.eq.f32.partialorder %v1928, 0.0
        %v1934 = vand.u32 %v1928, 2147483648
        %v1935 = vsel %vm1933, %v1934, %v1932
        %v1936 = vadd.f32 %v1935, 1e-06
        %v1937 = vrcp.pop %v1936
        %v1938 = vmul.f32 %v1923, %v1937
        %v1939 = vlaneseq
        %v1940 = vshrl.u32 %v1939, 7
        %v1941 = vsub.s32 4, %v1940
        %v1942 = vrot.slane %v608, %v1941
        %v1943 = vmul.f32 %v1942, %v1938
        %v1944 = vlaneseq
        %v1945 = vshrl.u32 %v1944, 7
        %v1946 = vsub.s32 5, %v1945
        %v1947 = vrot.slane %v608, %v1946
        %v1948 = vadd.f32 %v1943, %v1947
        %v1949 = vpack.c.bf16 %v1948, %v1948
        %v1950 = vld [vmem:[#allocation16] sm:$0xf]
        %v1951 = vld [vmem:[#allocation16 + $0x4] sm:$0xf]
        %v1952 = vld [vmem:[#allocation16 + $0x8] sm:$0xf]
        %v1953 = vld [vmem:[#allocation16 + $0xc] sm:$0xf]
        %v1954 = vld [vmem:[#allocation21] sm:$0x1]
        %v1956 = vlaneseq
        %v1957 = vshrl.u32 %v1956, 7
        %v1958 = vsub.s32 0, %v1957
        %v1959 = vrot.slane %v1954, %v1958
        %v1965 = vunpack.c.l.b16 %v1950
        %v1966 = vunpack.c.l.b16 %v1951
        %v1967 = vunpack.c.l.b16 %v1952
        %v1968 = vunpack.c.l.b16 %v1953
        %v1969 = vpack.c.b16 %v1966, %v1965
        %v1970 = vpack.c.b16 %v1968, %v1967
        %v1974 = vsel %vm767, %v1949, 0
        %1976 = vmatprep.subr.bf16.mxu0 0
        %1977 = vmatpush1.bf16.msra.mxu0 %v1969
        %1978 = vmatprep.subr.bf16.mxu0 0
        %1979 = vmatpush1.bf16.msra.mxu0 %v1970
        %1980 = vmatprep.subr.bf16.mxu0 0
        %1981 = vmatpush1.bf16.msra.mxu0 0
        %1982 = vmatprep.subr.bf16.mxu0 0
        %1983 = vmatpush1.bf16.msra.mxu0 0
        %1984 = vmatprep.subr.bf16.mxu0 0
        %1985 = vmatpush1.bf16.msra.mxu0 0
        %1986 = vmatprep.subr.bf16.mxu0 0
        %1987 = vmatpush1.bf16.msra.mxu0 0
        %1988 = vmatprep.subr.bf16.mxu0 0
        %1989 = vmatpush1.bf16.msra.mxu0 0
        %1990 = vmatprep.subr.bf16.mxu0 0
        %1991 = vmatpush1.bf16.msra.mxu0 0
        %1992 = vmatprep.subr.bf16.mxu0 0
        %1993 = vmatpush1.bf16.msra.mxu0 0
        %1994 = vmatprep.subr.bf16.mxu0 0
        %1995 = vmatpush1.bf16.msra.mxu0 0
        %1996 = vmatprep.subr.bf16.mxu0 0
        %1997 = vmatpush1.bf16.msra.mxu0 0
        %1998 = vmatprep.subr.bf16.mxu0 0
        %1999 = vmatpush1.bf16.msra.mxu0 0
        %2000 = vmatprep.subr.bf16.mxu0 0
        %2001 = vmatpush1.bf16.msra.mxu0 0
        %2002 = vmatprep.subr.bf16.mxu0 0
        %2003 = vmatpush1.bf16.msra.mxu0 0
        %2004 = vmatprep.subr.bf16.mxu0 0
        %2005 = vmatpush1.bf16.msra.mxu0 0
        %2006 = vmatprep.subr.bf16.mxu0 0
        %2007 = vmatpush1.bf16.msra.mxu0 0
        %2008 = vmatprep.mubr.bf16.mxu0 0
        %2009 = vmatmul.mubr.bf16.gmra.mrb[0].mxu0 %v1974
        %v2010 = vpop.f32.mrb[0].mxu0
        %v2011 = vadd.f32 %v1959, %v2010
        %v2012 = vpop.f32.mrb[0].mxu0
        %v2013 = vpop.f32.mrb[0].mxu0
        %v2014 = vpop.f32.mrb[0].mxu0
        %2015 = vdwg.mxu0
        %v2016 = vmul.f32 %v2011, 0.5
        %v2017 = vmul.f32 %v2011, 0.70710677
        %v2018 = verf.f32.pop %v2017
        %v2019 = vadd.f32 %v2018, 1.0
        %v2020 = vmul.f32 %v2016, %v2019
        %v2021 = vpack.c.bf16 %v2020, %v2020
        %v2022 = vld [vmem:[#allocation18] sm:$0xf]
        %v2023 = vld [vmem:[#allocation18 + $0x4] sm:$0xf]
        %v2024 = vld [vmem:[#allocation18 + $0x8] sm:$0xf]
        %v2025 = vld [vmem:[#allocation18 + $0xc] sm:$0xf]
        %v2026 = vld [vmem:[#allocation18 + $0x10] sm:$0xf]
        %v2027 = vld [vmem:[#allocation18 + $0x14] sm:$0xf]
        %v2028 = vld [vmem:[#allocation18 + $0x18] sm:$0xf]
        %v2029 = vld [vmem:[#allocation18 + $0x1c] sm:$0xf]
        %v2030 = vlaneseq
        %v2031 = vshrl.u32 %v2030, 7
        %v2032 = vsub.s32 6, %v2031
        %v2033 = vrot.slane %v608, %v2032
        %v2042 = vunpack.c.l.b16 %v2022
        %v2043 = vunpack.c.l.b16 %v2023
        %v2044 = vunpack.c.l.b16 %v2024
        %v2045 = vunpack.c.l.b16 %v2025
        %v2046 = vunpack.c.l.b16 %v2026
        %v2047 = vunpack.c.l.b16 %v2027
        %v2048 = vunpack.c.l.b16 %v2028
        %v2049 = vunpack.c.l.b16 %v2029
        %v2050 = vpack.c.b16 %v2043, %v2042
        %v2051 = vpack.c.b16 %v2045, %v2044
        %v2052 = vpack.c.b16 %v2047, %v2046
        %v2053 = vpack.c.b16 %v2049, %v2048
        %vm2058 = vcmask 523264
        %v2060 = vsel %vm2058, %v2021, 0
        %2062 = vmatprep.subr.bf16.mxu0 0
        %2063 = vmatpush1.bf16.msra.mxu0 %v2050
        %2064 = vmatprep.subr.bf16.mxu0 0
        %2065 = vmatpush1.bf16.msra.mxu0 %v2051
        %2066 = vmatprep.subr.bf16.mxu0 0
        %2067 = vmatpush1.bf16.msra.mxu0 %v2052
        %2068 = vmatprep.subr.bf16.mxu0 0
        %2069 = vmatpush1.bf16.msra.mxu0 %v2053
        %2070 = vmatprep.subr.bf16.mxu0 0
        %2071 = vmatpush1.bf16.msra.mxu0 0
        %2072 = vmatprep.subr.bf16.mxu0 0
        %2073 = vmatpush1.bf16.msra.mxu0 0
        %2074 = vmatprep.subr.bf16.mxu0 0
        %2075 = vmatpush1.bf16.msra.mxu0 0
        %2076 = vmatprep.subr.bf16.mxu0 0
        %2077 = vmatpush1.bf16.msra.mxu0 0
        %2078 = vmatprep.subr.bf16.mxu0 0
        %2079 = vmatpush1.bf16.msra.mxu0 0
        %2080 = vmatprep.subr.bf16.mxu0 0
        %2081 = vmatpush1.bf16.msra.mxu0 0
        %2082 = vmatprep.subr.bf16.mxu0 0
        %2083 = vmatpush1.bf16.msra.mxu0 0
        %2084 = vmatprep.subr.bf16.mxu0 0
        %2085 = vmatpush1.bf16.msra.mxu0 0
        %2086 = vmatprep.subr.bf16.mxu0 0
        %2087 = vmatpush1.bf16.msra.mxu0 0
        %2088 = vmatprep.subr.bf16.mxu0 0
        %2089 = vmatpush1.bf16.msra.mxu0 0
        %2090 = vmatprep.subr.bf16.mxu0 0
        %2091 = vmatpush1.bf16.msra.mxu0 0
        %2092 = vmatprep.subr.bf16.mxu0 0
        %2093 = vmatpush1.bf16.msra.mxu0 0
        %2094 = vmatprep.mubr.bf16.mxu0 0
        %2095 = vmatmul.mubr.bf16.gmra.mrb[0].mxu0 %v2060
        %v2096 = vpop.f32.mrb[0].mxu0
        %v2097 = vadd.f32 %v2033, %v2096
        %v2098 = vpop.f32.mrb[0].mxu0
        %v2099 = vpop.f32.mrb[0].mxu0
        %v2100 = vpop.f32.mrb[0].mxu0
        %2101 = vdwg.mxu0
        %v2102 = vadd.f32 %v2097, %v1948
        %v2103 = vsel %vm767, %v2102, 0.0
        %2104 = vadd.xlane.f32.xlu0 %v2103
        %v2105 = vpop.xlane.xlu0 %2104
        %v2106 = vmul.f32 %v2105, %v1921
        %v2107 = vsub.f32 %v2102, %v2106
        %v2108 = vmul.f32 %v2107, %v2107
        %v2109 = vsel %vm767, %v2108, 0.0
        %2110 = vadd.xlane.f32.xlu0 %v2109
        %v2111 = vpop.xlane.xlu0 %2110
        %v2112 = vmul.f32 %v2111, 0.032258064
        %v2113 = vrsqrt.pop %v2112
        %v2114 = vmul.f32 %v2112, %v2113
        %vm2115 = vcmp.eq.f32.partialorder %v2112, inf
        %v2116 = vsel %vm2115, %v2112, %v2114
        %vm2117 = vcmp.eq.f32.partialorder %v2112, 0.0
        %v2118 = vand.u32 %v2112, 2147483648
        %v2119 = vsel %vm2117, %v2118, %v2116
        %v2120 = vadd.f32 %v2119, 1e-06
        %v2121 = vrcp.pop %v2120
        %v2122 = vmul.f32 %v2107, %v2121
        %v2123 = vlaneseq
        %v2124 = vshrl.u32 %v2123, 7
        %v2125 = vsub.s32 7, %v2124
        %v2126 = vrot.slane %v608, %v2125
        %v2127 = vmul.f32 %v2126, %v2122
        %v2128 = vlaneseq
        %v2129 = vshrl.u32 %v2128, 7
        %v2130 = vsub.s32 0, %v2129
        %v2131 = vrot.slane %v609, %v2130
        %v2132 = vadd.f32 %v2127, %v2131
        %2133 = vst.msk [vmem:[%s606] sm:$0xff] %vm767, %v2132
        %s2134 = sand.u32 %s307, 1
        %s2135 = scalar_lea.sflag [#allocation6], %s2134
        %s2136 = sand.u32 %s307, 1
        %s2137 = smul.addr %s2136, 8
        %s2138 = scalar_lea.vmem [#allocation22], %s2137
        // Predicated region
        $region113: #{tpu_custom_call.1} parent=63 // pred_check
          %p2139 = pneg %p317
        $region114: #{tpu_custom_call.1} parent=63 // pred_check_branch
          %2141 = sbr.rel (%p2139) target = $region116
        $region115: #{tpu_custom_call.1} parent=63 // pred_region
          %s2143 = ssub.s32 128, 128
          %2144 = vsyncadd %s2135, %s2143
          %s2145 = sadd.s32 %s40, %s39
          %s2146 = smul.addr %s2145, 128
          %s2147 = scalar_lea.hbm %s11, %s2146
          %s2149 = sshll.u32 %s2138, 4
          %s2150 = int_to_ptr.vmem [resolvable:$true] %s2149
          %2152 = dma.vmem_to_hbm [thread:$0]  %s2150, 128, %s2147, %s2135
        $region116: #{tpu_custom_call.1} parent=63 // pred_fallthru
          _
      $region64: #{tpu_custom_call.1} parent=5 // pred_fallthru
        _
      %p2153 = scmp.le.s32.totalorder 2, %s30
      // Predicated region
      $region117: #{tpu_custom_call.1} parent=5 // pred_check
        %p2154 = pneg %p2153
      $region118: #{tpu_custom_call.1} parent=5 // pred_check_branch
        %2156 = sbr.rel (%p2154) target = $region120
      $region119: #{tpu_custom_call.1} parent=5 // pred_region
        %s2157 = ssub.s32 %s30, 2
        // Predicated region
        $region121: #{tpu_custom_call.1} parent=119 // pred_check
          %p2158 = pneg %p323
        $region122: #{tpu_custom_call.1} parent=119 // pred_check_branch
          %2160 = sbr.rel (%p2158) target = $region124
        $region123: #{tpu_custom_call.1} parent=119 // pred_region
          %s2161 = sand.u32 %s308, 1
          %s2162 = scalar_lea.sflag [#allocation6], %s2161
          %s2163 = sand.u32 %s308, 1
          %s2164 = smul.addr %s2163, 8
          %s2165 = scalar_lea.vmem [#allocation22], %s2164
          %2166 = dma.done %s2162, 128
        $region124: #{tpu_custom_call.1} parent=119 // pred_fallthru
          _
      $region120: #{tpu_custom_call.1} parent=5 // pred_fallthru
        _
    $region6: #{tpu_custom_call.1} parent=1 // loop_footer
      %s34 = sadd.s32 1, %s30
    $region7: #{tpu_custom_call.1} parent=1 // loop_footer_branch
      %29 = sbr.rel target = $region3
    $region8: #{tpu_custom_call.1} parent=1 // loop_exit
      _
    %2167 = vsyncpa [#allocation5], 1
    %s2168 = scalar_lea.sflag [#allocation5], 1
    %2169 = vsyncpa %s2168, 1
    %2170 = vsyncpa [#allocation8], 1
    %s2171 = scalar_lea.sflag [#allocation8], 1
    %2172 = vsyncpa %s2171, 1
    %2173 = vsyncpa [#allocation11], 1
    %2174 = vsyncpa [#allocation14], 1
    %2175 = vsyncpa [#allocation17], 1
    %2176 = vsyncpa [#allocation20], 1
    %2177 = vsyncpa [#allocation6], 1
    %s2178 = scalar_lea.sflag [#allocation6], 1
    %2179 = vsyncpa %s2178, 1

</llo_original>
